<compile_context>
chip_gen: v7x
topology: tpu7x:2x2x1
jax: 0.10.0
libtpu: 0.0.40
codegen_flags: <defaults>
</compile_context>

<pallas_src>
import functools

import jax
import jax.numpy as jnp
from jax import lax
from jax.experimental import pallas as pl
from jax.experimental.pallas import tpu as pltpu


def _round_up(x, m):
    return (x + m - 1) // m * m


def _bottleneck_kernel(x_ref, mask_ref, w1_ref, b1_ref, w2_ref, b2_ref,
                       w3_ref, b3_ref, o_ref, pad_ref, *, H, W):
    """One batch element per grid step; all convs expressed as MXU matmuls.

    x_ref   : (1, H*(W+2), Cin) f32  width-padded, spatially flattened NHWC
    mask_ref: (H*(W+2), 1)      f32  1.0 on real columns, 0.0 on pad columns
    w*_ref  : bf16 weights with the BN scale already folded in
    b*_ref  : (1, C) f32 folded BN biases
    pad_ref : (pad_rows, P) bf16 scratch, flat zero-padded conv2 workspace
    """
    W2 = W + 2
    HW2 = H * W2
    P = w1_ref.shape[1]
    # Leading slack rows so the interior store below starts on a sublane
    # (multiple-of-8) boundary.
    lead = (-(W2 + 1)) % 8
    interior = lead + W2 + 1                  # multiple of 8 by construction
    pad_rows = pad_ref.shape[0]
    tail = pad_rows - interior - HW2

    # Zero only the never-written head/tail (top/bottom halo) rows of the flat
    # workspace.  The interior slab is fully rewritten below and the in-slab
    # left/right halo cells receive masked zeros, so nothing else is needed.
    pad_ref[pl.ds(0, interior), :] = jnp.zeros((interior, P), pad_ref.dtype)
    pad_ref[pl.ds(interior + HW2, tail), :] = jnp.zeros((tail, P), pad_ref.dtype)

    # ---- conv1 (1x1) + bn1 + relu -------------------------------------------
    o1 = jnp.dot(x_ref[0].astype(jnp.bfloat16), w1_ref[...],
                 preferred_element_type=jnp.float32)
    o1 = jnp.maximum(o1 + b1_ref[...], 0.0) * mask_ref[...]      # (HW2, P)
    # Single contiguous, sublane-aligned store of the whole interior slab.
    pad_ref[pl.ds(interior, HW2), :] = o1.astype(pad_ref.dtype)

    # ---- conv2 (3x3, pad=1, stride=1): 9 contiguous taps of the flat pad ----
    # acc row j corresponds to output pixel (r, c) with j = r*(W+2) + c; rows
    # with c >= W are junk and are dropped by the wrapper after the kernel.
    # TODO(synk): for planes < 128 an im2col (HW2, 9P) x (9P, P) matmul would
    #             fill the 256-wide MXU (v6e/v7x) better than 9 K=P matmuls.
    acc = jnp.zeros((HW2, P), jnp.float32)
    for ky in range(3):
        for kx in range(3):
            tap = pad_ref[pl.ds(lead + ky * W2 + kx, HW2), :]
            acc = acc + jnp.dot(tap, w2_ref[3 * ky + kx],
                                preferred_element_type=jnp.float32)
    o2 = jnp.maximum(acc + b2_ref[...], 0.0)                     # (HW2, P)

    # ---- conv3 (1x1) + bn3 + residual add + relu ----------------------------
    o3 = jnp.dot(o2.astype(jnp.bfloat16), w3_ref[...],
                 preferred_element_type=jnp.float32) + b3_ref[...]
    # Re-read x for the residual (short live range; overlaps under MXU work).
    o_ref[0] = jnp.maximum(o3 + x_ref[0], 0.0).astype(o_ref.dtype)


def _fold_bn(gamma, beta, mean, var, eps=1e-5):
    scale = (gamma / jnp.sqrt(var + eps)).astype(jnp.float32)
    bias = (beta - mean * scale).astype(jnp.float32)
    return scale, bias


def bottleneck_pallas(x_nchw, params):
    """x_nchw: (N, Cin, H, W) float32 (NCHW like PyTorch). Returns same shape."""
    N, Cin, H, W = x_nchw.shape
    P = params["w1"].shape[1]
    assert Cin == 4 * P, "residual add requires inplanes == 4 * planes"

    W2 = W + 2
    HW2 = H * W2
    lead = (-(W2 + 1)) % 8
    interior = lead + W2 + 1
    pad_rows = _round_up(interior + HW2 + W2 + 1, 8)

    # Fold BN into scale/bias, fold the scale into the conv weights, and make
    # the MXU operands bf16 (accumulation stays f32 in-kernel).
    s1, b1 = _fold_bn(params["g1"], params["be1"], params["m1"], params["v1"])
    s2, b2 = _fold_bn(params["g2"], params["be2"], params["m2"], params["v2"])
    s3, b3 = _fold_bn(params["g3"], params["be3"], params["m3"], params["v3"])
    w1 = (params["w1"] * s1[None, :]).astype(jnp.bfloat16)                 # (Cin, P)
    w2 = (params["w2"] * s2[None, None, None, :]).astype(jnp.bfloat16)
    w2 = w2.reshape(9, P, P)                                               # (9, P, P)
    w3 = (params["w3"] * s3[None, :]).astype(jnp.bfloat16)                 # (P, Cin)
    b1 = b1[None, :]
    b2 = b2[None, :]
    b3 = b3[None, :]

    # NCHW -> NHWC, zero-pad the width to W+2 and flatten spatial dims so every
    # in-kernel access is a contiguous (rows, channels) slab.
    x = jnp.transpose(x_nchw, (0, 2, 3, 1)).astype(jnp.float32)
    x = jnp.pad(x, ((0, 0), (0, 0), (0, 2), (0, 0)))
    x = x.reshape(N, HW2, Cin)

    # 1.0 on real columns, 0.0 on the two pad columns of each row.
    mask = (jnp.arange(HW2, dtype=jnp.int32) % W2 < W).astype(jnp.float32)[:, None]

    def full(shape):
        return pl.BlockSpec(shape, lambda n, _s=shape: (0,) * len(_s))

    # Explicit VMEM budget: double-buffered x/out blocks + weights + scratch.
    block_bytes = HW2 * Cin * 4
    weight_bytes = (Cin * P + 9 * P * P + P * Cin) * 2 + (2 * P + Cin + HW2) * 4
    live_bytes = pad_rows * P * 2 + 4 * HW2 * max(P, Cin) * 4
    vmem_limit = int(min(max(4 * block_bytes + 2 * weight_bytes + live_bytes
                             + (8 << 20), 16 << 20), 64 << 20))
    # TODO(synk): for v7x (2 TCs, 64 MiB VMEM) add a "parallel" H-tile grid
    #             axis with a 1-row halo so both cores are used at small N.

    out = pl.pallas_call(
        functools.partial(_bottleneck_kernel, H=H, W=W),
        out_shape=jax.ShapeDtypeStruct((N, HW2, Cin), jnp.float32),
        grid_spec=pltpu.PrefetchScalarGridSpec(
            num_scalar_prefetch=0,
            grid=(N,),
            in_specs=[
                pl.BlockSpec((1, HW2, Cin), lambda n: (n, 0, 0)),   # x
                full((HW2, 1)),                                     # column mask
                full((Cin, P)), full((1, P)),                       # w1, b1
                full((9, P, P)), full((1, P)),                      # w2, b2
                full((P, Cin)), full((1, Cin)),                     # w3, b3
            ],
            out_specs=pl.BlockSpec((1, HW2, Cin), lambda n: (n, 0, 0)),
            scratch_shapes=[pltpu.VMEM((pad_rows, P), jnp.bfloat16)],
        ),
        compiler_params=pltpu.CompilerParams(
            dimension_semantics=("parallel",),
            vmem_limit_bytes=vmem_limit),
    )(x, mask, w1, b1, w2, b2, w3, b3)

    # Drop the two pad columns and go back to NCHW.
    out = out.reshape(N, H, W2, Cin)[:, :, :W, :]
    return jnp.transpose(out, (0, 3, 1, 2))


def bottleneck_reference(x_nchw, params):
    """Pure-JAX f32 reference (lax convs) matching the PyTorch forward."""
    x = jnp.transpose(x_nchw, (0, 2, 3, 1))  # NHWC
    dn = ("NHWC", "HWIO", "NHWC")

    def bn(y, g, be, m, v, eps=1e-5):
        return (y - m) / jnp.sqrt(v + eps) * g + be

    w1 = params["w1"][None, None]                       # (1,1,Cin,P)
    w2 = params["w2"]                                   # (3,3,P,P) HWIO
    w3 = params["w3"][None, None]                       # (1,1,P,Cin)

    o = lax.conv_general_dilated(x, w1, (1, 1), "VALID", dimension_numbers=dn)
    o = jax.nn.relu(bn(o, params["g1"], params["be1"], params["m1"], params["v1"]))
    o = lax.conv_general_dilated(o, w2, (1, 1), [(1, 1), (1, 1)],
                                 dimension_numbers=dn)
    o = jax.nn.relu(bn(o, params["g2"], params["be2"], params["m2"], params["v2"]))
    o = lax.conv_general_dilated(o, w3, (1, 1), "VALID", dimension_numbers=dn)
    o = bn(o, params["g3"], params["be3"], params["m3"], params["v3"])
    o = jax.nn.relu(o + x)
    return jnp.transpose(o, (0, 3, 1, 2))


def make_params(key, inplanes, planes):
    ks = jax.random.split(key, 12)
    P, Cin = planes, inplanes
    f32 = jnp.float32
    return dict(
        w1=0.1 * jax.random.normal(ks[0], (Cin, P), f32),
        w2=0.1 * jax.random.normal(ks[1], (3, 3, P, P), f32),
        w3=0.1 * jax.random.normal(ks[2], (P, 4 * P), f32),
        g1=1.0 + 0.1 * jax.random.normal(ks[3], (P,), f32),
        be1=0.1 * jax.random.normal(ks[4], (P,), f32),
        m1=0.1 * jax.random.normal(ks[5], (P,), f32),
        v1=jnp.abs(jax.random.normal(ks[6], (P,), f32)) + 0.5,
        g2=1.0 + 0.1 * jax.random.normal(ks[7], (P,), f32),
        be2=0.1 * jax.random.normal(ks[8], (P,), f32),
        m2=0.1 * jax.random.normal(ks[9], (P,), f32),
        v2=jnp.abs(jax.random.normal(ks[10], (P,), f32)) + 0.5,
        g3=1.0 + 0.1 * jax.random.normal(ks[11], (4 * P,), f32),
        be3=jnp.zeros((4 * P,), f32),
        m3=jnp.zeros((4 * P,), f32),
        v3=jnp.ones((4 * P,), f32),
    )


if __name__ == "__main__":
    key = jax.random.PRNGKey(0)
    k_x, k_p = jax.random.split(key)

    N, planes, H, W = 2, 4, 8, 8
    inplanes = planes * 4            # 16, so downsample=None is valid
    x = jax.random.normal(k_x, (N, inplanes, H, W), jnp.float32)  # NCHW
    params = make_params(k_p, inplanes, planes)

    out = jax.block_until_ready(bottleneck_pallas(x, params))
    ref = bottleneck_reference(x, params)

    assert out.shape == (N, inplanes, H, W)
    err = float(jnp.max(jnp.abs(out - ref)))
    # bf16 MXU operands vs. f32 reference -> modest tolerance.
    assert err < 5e-2, f"max abs error too large: {err}"

    print("KERNEL_OK")
</pallas_src>

<mosaic_0001>
module attributes {stable_mosaic.version = 11 : i64} {
  func.func @_bottleneck_kernel(%arg0: i32, %arg1: memref<1x80x16xf32, #tpu.memory_space<vmem>>, %arg2: memref<80x1xf32, #tpu.memory_space<vmem>>, %arg3: memref<16x4xbf16, #tpu.memory_space<vmem>>, %arg4: memref<1x4xf32, #tpu.memory_space<vmem>>, %arg5: memref<9x4x4xbf16, #tpu.memory_space<vmem>>, %arg6: memref<1x4xf32, #tpu.memory_space<vmem>>, %arg7: memref<4x16xbf16, #tpu.memory_space<vmem>>, %arg8: memref<1x16xf32, #tpu.memory_space<vmem>>, %arg9: memref<1x80x16xf32, #tpu.memory_space<vmem>>, %arg10: memref<112x4xbf16, #tpu.memory_space<vmem>>) attributes {dimension_semantics = [#tpu.dimension_semantics<parallel>], iteration_bounds = array<i64: 2>, scalar_prefetch = 0 : i64, scratch_operands = 1 : i64, tpu.core_type = #tpu.core_type<tc>, window_params = [{transform_indices = @transform_0, window_bounds = array<i64: 1, 80, 16>}, {pipeline_mode = #tpu.pipeline_mode<synchronous>, transform_indices = @transform_1, window_bounds = array<i64: 80, 1>}, {pipeline_mode = #tpu.pipeline_mode<synchronous>, transform_indices = @transform_2, window_bounds = array<i64: 16, 4>}, {pipeline_mode = #tpu.pipeline_mode<synchronous>, transform_indices = @transform_3, window_bounds = array<i64: 1, 4>}, {pipeline_mode = #tpu.pipeline_mode<synchronous>, transform_indices = @transform_4, window_bounds = array<i64: 9, 4, 4>}, {pipeline_mode = #tpu.pipeline_mode<synchronous>, transform_indices = @transform_5, window_bounds = array<i64: 1, 4>}, {pipeline_mode = #tpu.pipeline_mode<synchronous>, transform_indices = @transform_6, window_bounds = array<i64: 4, 16>}, {pipeline_mode = #tpu.pipeline_mode<synchronous>, transform_indices = @transform_7, window_bounds = array<i64: 1, 16>}, {transform_indices = @transform_8, window_bounds = array<i64: 1, 80, 16>}]} {
    %cst = arith.constant 0.000000e+00 : bf16
    %0 = vector.broadcast %cst : bf16 to vector<16x4xbf16>
    %c0 = arith.constant 0 : index
    %c0_0 = arith.constant 0 : index
    %1 = vector.load %arg10[%c0, %c0_0] : memref<112x4xbf16, #tpu.memory_space<vmem>>, vector<16x4xbf16>
    tpu.vector_store %arg10[%c0, %c0_0], %0 {strides = array<i32>} : memref<112x4xbf16, #tpu.memory_space<vmem>>, vector<16x4xbf16>,
    %cst_1 = arith.constant 0.000000e+00 : bf16
    %2 = vector.broadcast %cst_1 : bf16 to vector<16x4xbf16>
    %c96 = arith.constant 96 : index
    %c0_2 = arith.constant 0 : index
    %3 = vector.load %arg10[%c96, %c0_2] : memref<112x4xbf16, #tpu.memory_space<vmem>>, vector<16x4xbf16>
    tpu.vector_store %arg10[%c96, %c0_2], %2 {strides = array<i32>} : memref<112x4xbf16, #tpu.memory_space<vmem>>, vector<16x4xbf16>,
    %c0_3 = arith.constant 0 : index
    %c0_4 = arith.constant 0 : index
    %c0_5 = arith.constant 0 : index
    %4 = vector.load %arg1[%c0_3, %c0_4, %c0_5] : memref<1x80x16xf32, #tpu.memory_space<vmem>>, vector<1x80x16xf32>
    %5 = vector.shape_cast %4 : vector<1x80x16xf32> to vector<80x16xf32>
    %6 = arith.truncf %5 : vector<80x16xf32> to vector<80x16xbf16>
    %c0_6 = arith.constant 0 : index
    %c0_7 = arith.constant 0 : index
    %7 = vector.load %arg3[%c0_6, %c0_7] : memref<16x4xbf16, #tpu.memory_space<vmem>>, vector<16x4xbf16>
    %cst_8 = arith.constant dense<0.000000e+00> : vector<80x4xf32>
    %8 = tpu.matmul %6, %7, %cst_8 {dimension_numbers = #tpu.dot_dimension_numbers<[1], [0], [0], [1], [0, 0, 1, 1], [], []>} : vector<80x16xbf16>, vector<16x4xbf16>, vector<80x4xf32> -> vector<80x4xf32>
    %c0_9 = arith.constant 0 : index
    %c0_10 = arith.constant 0 : index
    %9 = vector.load %arg4[%c0_9, %c0_10] : memref<1x4xf32, #tpu.memory_space<vmem>>, vector<1x4xf32>
    %10 = vector.broadcast %9 : vector<1x4xf32> to vector<80x4xf32>
    %11 = arith.addf %8, %10 : vector<80x4xf32>
    %cst_11 = arith.constant 0.000000e+00 : f32
    %12 = vector.broadcast %cst_11 : f32 to vector<80x4xf32>
    %13 = arith.maximumf %11, %12 : vector<80x4xf32>
    %c0_12 = arith.constant 0 : index
    %c0_13 = arith.constant 0 : index
    %14 = vector.load %arg2[%c0_12, %c0_13] : memref<80x1xf32, #tpu.memory_space<vmem>>, vector<80x1xf32>
    %15 = vector.broadcast %14 : vector<80x1xf32> to vector<80x4xf32>
    %16 = arith.mulf %13, %15 : vector<80x4xf32>
    %17 = arith.truncf %16 : vector<80x4xf32> to vector<80x4xbf16>
    %c16 = arith.constant 16 : index
    %c0_14 = arith.constant 0 : index
    %18 = vector.load %arg10[%c16, %c0_14] : memref<112x4xbf16, #tpu.memory_space<vmem>>, vector<80x4xbf16>
    tpu.vector_store %arg10[%c16, %c0_14], %17 {strides = array<i32>} : memref<112x4xbf16, #tpu.memory_space<vmem>>, vector<80x4xbf16>,
    %cst_15 = arith.constant 0.000000e+00 : f32
    %19 = vector.broadcast %cst_15 : f32 to vector<80x4xf32>
    %c5 = arith.constant 5 : index
    %c0_16 = arith.constant 0 : index
    %20 = vector.load %arg10[%c5, %c0_16] : memref<112x4xbf16, #tpu.memory_space<vmem>>, vector<80x4xbf16>
    %c0_17 = arith.constant 0 : index
    %c0_18 = arith.constant 0 : index
    %c0_19 = arith.constant 0 : index
    %21 = vector.load %arg5[%c0_17, %c0_18, %c0_19] : memref<9x4x4xbf16, #tpu.memory_space<vmem>>, vector<1x4x4xbf16>
    %22 = vector.shape_cast %21 : vector<1x4x4xbf16> to vector<4x4xbf16>
    %cst_20 = arith.constant dense<0.000000e+00> : vector<80x4xf32>
    %23 = tpu.matmul %20, %22, %cst_20 {dimension_numbers = #tpu.dot_dimension_numbers<[1], [0], [0], [1], [0, 0, 1, 1], [], []>} : vector<80x4xbf16>, vector<4x4xbf16>, vector<80x4xf32> -> vector<80x4xf32>
    %24 = arith.addf %19, %23 : vector<80x4xf32>
    %c6 = arith.constant 6 : index
    %c0_21 = arith.constant 0 : index
    %25 = vector.load %arg10[%c6, %c0_21] : memref<112x4xbf16, #tpu.memory_space<vmem>>, vector<80x4xbf16>
    %c1 = arith.constant 1 : index
    %c0_22 = arith.constant 0 : index
    %c0_23 = arith.constant 0 : index
    %26 = vector.load %arg5[%c1, %c0_22, %c0_23] : memref<9x4x4xbf16, #tpu.memory_space<vmem>>, vector<1x4x4xbf16>
    %27 = vector.shape_cast %26 : vector<1x4x4xbf16> to vector<4x4xbf16>
    %cst_24 = arith.constant dense<0.000000e+00> : vector<80x4xf32>
    %28 = tpu.matmul %25, %27, %cst_24 {dimension_numbers = #tpu.dot_dimension_numbers<[1], [0], [0], [1], [0, 0, 1, 1], [], []>} : vector<80x4xbf16>, vector<4x4xbf16>, vector<80x4xf32> -> vector<80x4xf32>
    %29 = arith.addf %24, %28 : vector<80x4xf32>
    %c7 = arith.constant 7 : index
    %c0_25 = arith.constant 0 : index
    %30 = vector.load %arg10[%c7, %c0_25] : memref<112x4xbf16, #tpu.memory_space<vmem>>, vector<80x4xbf16>
    %c2 = arith.constant 2 : index
    %c0_26 = arith.constant 0 : index
    %c0_27 = arith.constant 0 : index
    %31 = vector.load %arg5[%c2, %c0_26, %c0_27] : memref<9x4x4xbf16, #tpu.memory_space<vmem>>, vector<1x4x4xbf16>
    %32 = vector.shape_cast %31 : vector<1x4x4xbf16> to vector<4x4xbf16>
    %cst_28 = arith.constant dense<0.000000e+00> : vector<80x4xf32>
    %33 = tpu.matmul %30, %32, %cst_28 {dimension_numbers = #tpu.dot_dimension_numbers<[1], [0], [0], [1], [0, 0, 1, 1], [], []>} : vector<80x4xbf16>, vector<4x4xbf16>, vector<80x4xf32> -> vector<80x4xf32>
    %34 = arith.addf %29, %33 : vector<80x4xf32>
    %c15 = arith.constant 15 : index
    %c0_29 = arith.constant 0 : index
    %35 = vector.load %arg10[%c15, %c0_29] : memref<112x4xbf16, #tpu.memory_space<vmem>>, vector<80x4xbf16>
    %c3 = arith.constant 3 : index
    %c0_30 = arith.constant 0 : index
    %c0_31 = arith.constant 0 : index
    %36 = vector.load %arg5[%c3, %c0_30, %c0_31] : memref<9x4x4xbf16, #tpu.memory_space<vmem>>, vector<1x4x4xbf16>
    %37 = vector.shape_cast %36 : vector<1x4x4xbf16> to vector<4x4xbf16>
    %cst_32 = arith.constant dense<0.000000e+00> : vector<80x4xf32>
    %38 = tpu.matmul %35, %37, %cst_32 {dimension_numbers = #tpu.dot_dimension_numbers<[1], [0], [0], [1], [0, 0, 1, 1], [], []>} : vector<80x4xbf16>, vector<4x4xbf16>, vector<80x4xf32> -> vector<80x4xf32>
    %39 = arith.addf %34, %38 : vector<80x4xf32>
    %c16_33 = arith.constant 16 : index
    %c0_34 = arith.constant 0 : index
    %40 = vector.load %arg10[%c16_33, %c0_34] : memref<112x4xbf16, #tpu.memory_space<vmem>>, vector<80x4xbf16>
    %c4 = arith.constant 4 : index
    %c0_35 = arith.constant 0 : index
    %c0_36 = arith.constant 0 : index
    %41 = vector.load %arg5[%c4, %c0_35, %c0_36] : memref<9x4x4xbf16, #tpu.memory_space<vmem>>, vector<1x4x4xbf16>
    %42 = vector.shape_cast %41 : vector<1x4x4xbf16> to vector<4x4xbf16>
    %cst_37 = arith.constant dense<0.000000e+00> : vector<80x4xf32>
    %43 = tpu.matmul %40, %42, %cst_37 {dimension_numbers = #tpu.dot_dimension_numbers<[1], [0], [0], [1], [0, 0, 1, 1], [], []>} : vector<80x4xbf16>, vector<4x4xbf16>, vector<80x4xf32> -> vector<80x4xf32>
    %44 = arith.addf %39, %43 : vector<80x4xf32>
    %c17 = arith.constant 17 : index
    %c0_38 = arith.constant 0 : index
    %45 = vector.load %arg10[%c17, %c0_38] : memref<112x4xbf16, #tpu.memory_space<vmem>>, vector<80x4xbf16>
    %c5_39 = arith.constant 5 : index
    %c0_40 = arith.constant 0 : index
    %c0_41 = arith.constant 0 : index
    %46 = vector.load %arg5[%c5_39, %c0_40, %c0_41] : memref<9x4x4xbf16, #tpu.memory_space<vmem>>, vector<1x4x4xbf16>
    %47 = vector.shape_cast %46 : vector<1x4x4xbf16> to vector<4x4xbf16>
    %cst_42 = arith.constant dense<0.000000e+00> : vector<80x4xf32>
    %48 = tpu.matmul %45, %47, %cst_42 {dimension_numbers = #tpu.dot_dimension_numbers<[1], [0], [0], [1], [0, 0, 1, 1], [], []>} : vector<80x4xbf16>, vector<4x4xbf16>, vector<80x4xf32> -> vector<80x4xf32>
    %49 = arith.addf %44, %48 : vector<80x4xf32>
    %c25 = arith.constant 25 : index
    %c0_43 = arith.constant 0 : index
    %50 = vector.load %arg10[%c25, %c0_43] : memref<112x4xbf16, #tpu.memory_space<vmem>>, vector<80x4xbf16>
    %c6_44 = arith.constant 6 : index
    %c0_45 = arith.constant 0 : index
    %c0_46 = arith.constant 0 : index
    %51 = vector.load %arg5[%c6_44, %c0_45, %c0_46] : memref<9x4x4xbf16, #tpu.memory_space<vmem>>, vector<1x4x4xbf16>
    %52 = vector.shape_cast %51 : vector<1x4x4xbf16> to vector<4x4xbf16>
    %cst_47 = arith.constant dense<0.000000e+00> : vector<80x4xf32>
    %53 = tpu.matmul %50, %52, %cst_47 {dimension_numbers = #tpu.dot_dimension_numbers<[1], [0], [0], [1], [0, 0, 1, 1], [], []>} : vector<80x4xbf16>, vector<4x4xbf16>, vector<80x4xf32> -> vector<80x4xf32>
    %54 = arith.addf %49, %53 : vector<80x4xf32>
    %c26 = arith.constant 26 : index
    %c0_48 = arith.constant 0 : index
    %55 = vector.load %arg10[%c26, %c0_48] : memref<112x4xbf16, #tpu.memory_space<vmem>>, vector<80x4xbf16>
    %c7_49 = arith.constant 7 : index
    %c0_50 = arith.constant 0 : index
    %c0_51 = arith.constant 0 : index
    %56 = vector.load %arg5[%c7_49, %c0_50, %c0_51] : memref<9x4x4xbf16, #tpu.memory_space<vmem>>, vector<1x4x4xbf16>
    %57 = vector.shape_cast %56 : vector<1x4x4xbf16> to vector<4x4xbf16>
    %cst_52 = arith.constant dense<0.000000e+00> : vector<80x4xf32>
    %58 = tpu.matmul %55, %57, %cst_52 {dimension_numbers = #tpu.dot_dimension_numbers<[1], [0], [0], [1], [0, 0, 1, 1], [], []>} : vector<80x4xbf16>, vector<4x4xbf16>, vector<80x4xf32> -> vector<80x4xf32>
    %59 = arith.addf %54, %58 : vector<80x4xf32>
    %c27 = arith.constant 27 : index
    %c0_53 = arith.constant 0 : index
    %60 = vector.load %arg10[%c27, %c0_53] : memref<112x4xbf16, #tpu.memory_space<vmem>>, vector<80x4xbf16>
    %c8 = arith.constant 8 : index
    %c0_54 = arith.constant 0 : index
    %c0_55 = arith.constant 0 : index
    %61 = vector.load %arg5[%c8, %c0_54, %c0_55] : memref<9x4x4xbf16, #tpu.memory_space<vmem>>, vector<1x4x4xbf16>
    %62 = vector.shape_cast %61 : vector<1x4x4xbf16> to vector<4x4xbf16>
    %cst_56 = arith.constant dense<0.000000e+00> : vector<80x4xf32>
    %63 = tpu.matmul %60, %62, %cst_56 {dimension_numbers = #tpu.dot_dimension_numbers<[1], [0], [0], [1], [0, 0, 1, 1], [], []>} : vector<80x4xbf16>, vector<4x4xbf16>, vector<80x4xf32> -> vector<80x4xf32>
    %64 = arith.addf %59, %63 : vector<80x4xf32>
    %c0_57 = arith.constant 0 : index
    %c0_58 = arith.constant 0 : index
    %65 = vector.load %arg6[%c0_57, %c0_58] : memref<1x4xf32, #tpu.memory_space<vmem>>, vector<1x4xf32>
    %66 = vector.broadcast %65 : vector<1x4xf32> to vector<80x4xf32>
    %67 = arith.addf %64, %66 : vector<80x4xf32>
    %cst_59 = arith.constant 0.000000e+00 : f32
    %68 = vector.broadcast %cst_59 : f32 to vector<80x4xf32>
    %69 = arith.maximumf %67, %68 : vector<80x4xf32>
    %70 = arith.truncf %69 : vector<80x4xf32> to vector<80x4xbf16>
    %c0_60 = arith.constant 0 : index
    %c0_61 = arith.constant 0 : index
    %71 = vector.load %arg7[%c0_60, %c0_61] : memref<4x16xbf16, #tpu.memory_space<vmem>>, vector<4x16xbf16>
    %cst_62 = arith.constant dense<0.000000e+00> : vector<80x16xf32>
    %72 = tpu.matmul %70, %71, %cst_62 {dimension_numbers = #tpu.dot_dimension_numbers<[1], [0], [0], [1], [0, 0, 1, 1], [], []>} : vector<80x4xbf16>, vector<4x16xbf16>, vector<80x16xf32> -> vector<80x16xf32>
    %c0_63 = arith.constant 0 : index
    %c0_64 = arith.constant 0 : index
    %73 = vector.load %arg8[%c0_63, %c0_64] : memref<1x16xf32, #tpu.memory_space<vmem>>, vector<1x16xf32>
    %74 = vector.broadcast %73 : vector<1x16xf32> to vector<80x16xf32>
    %75 = arith.addf %72, %74 : vector<80x16xf32>
    %c0_65 = arith.constant 0 : index
    %c0_66 = arith.constant 0 : index
    %c0_67 = arith.constant 0 : index
    %76 = vector.load %arg1[%c0_65, %c0_66, %c0_67] : memref<1x80x16xf32, #tpu.memory_space<vmem>>, vector<1x80x16xf32>
    %77 = vector.shape_cast %76 : vector<1x80x16xf32> to vector<80x16xf32>
    %78 = arith.addf %75, %77 : vector<80x16xf32>
    %cst_68 = arith.constant 0.000000e+00 : f32
    %79 = vector.broadcast %cst_68 : f32 to vector<80x16xf32>
    %80 = arith.maximumf %78, %79 : vector<80x16xf32>
    %c0_69 = arith.constant 0 : index
    %c0_70 = arith.constant 0 : index
    %c0_71 = arith.constant 0 : index
    %81 = vector.load %arg9[%c0_69, %c0_70, %c0_71] : memref<1x80x16xf32, #tpu.memory_space<vmem>>, vector<1x80x16xf32>
    %82 = vector.shape_cast %81 : vector<1x80x16xf32> to vector<80x16xf32>
    %83 = vector.shape_cast %80 : vector<80x16xf32> to vector<1x80x16xf32>
    tpu.vector_store %arg9[%c0_69, %c0_70, %c0_71], %83 {strides = array<i32>} : memref<1x80x16xf32, #tpu.memory_space<vmem>>, vector<1x80x16xf32>,
    return
  }
  func.func @transform_0(%arg0: i32) -> (i32, i32, i32) {
    %c0_i32 = arith.constant 0 : i32
    %c0_i32_0 = arith.constant 0 : i32
    %c0_i32_1 = arith.constant 0 : i32
    return %arg0, %c0_i32, %c0_i32_0 : i32, i32, i32
  }
  func.func @transform_1(%arg0: i32) -> (i32, i32) {
    %c0_i32 = arith.constant 0 : i32
    %c0_i32_0 = arith.constant 0 : i32
    %c0_i32_1 = arith.constant 0 : i32
    return %c0_i32, %c0_i32_0 : i32, i32
  }
  func.func @transform_2(%arg0: i32) -> (i32, i32) {
    %c0_i32 = arith.constant 0 : i32
    %c0_i32_0 = arith.constant 0 : i32
    %c0_i32_1 = arith.constant 0 : i32
    return %c0_i32, %c0_i32_0 : i32, i32
  }
  func.func @transform_3(%arg0: i32) -> (i32, i32) {
    %c0_i32 = arith.constant 0 : i32
    %c0_i32_0 = arith.constant 0 : i32
    %c0_i32_1 = arith.constant 0 : i32
    return %c0_i32, %c0_i32_0 : i32, i32
  }
  func.func @transform_4(%arg0: i32) -> (i32, i32, i32) {
    %c0_i32 = arith.constant 0 : i32
    %c0_i32_0 = arith.constant 0 : i32
    %c0_i32_1 = arith.constant 0 : i32
    %c0_i32_2 = arith.constant 0 : i32
    return %c0_i32, %c0_i32_0, %c0_i32_1 : i32, i32, i32
  }
  func.func @transform_5(%arg0: i32) -> (i32, i32) {
    %c0_i32 = arith.constant 0 : i32
    %c0_i32_0 = arith.constant 0 : i32
    %c0_i32_1 = arith.constant 0 : i32
    return %c0_i32, %c0_i32_0 : i32, i32
  }
  func.func @transform_6(%arg0: i32) -> (i32, i32) {
    %c0_i32 = arith.constant 0 : i32
    %c0_i32_0 = arith.constant 0 : i32
    %c0_i32_1 = arith.constant 0 : i32
    return %c0_i32, %c0_i32_0 : i32, i32
  }
  func.func @transform_7(%arg0: i32) -> (i32, i32) {
    %c0_i32 = arith.constant 0 : i32
    %c0_i32_0 = arith.constant 0 : i32
    %c0_i32_1 = arith.constant 0 : i32
    return %c0_i32, %c0_i32_0 : i32, i32
  }
  func.func @transform_8(%arg0: i32) -> (i32, i32, i32) {
    %c0_i32 = arith.constant 0 : i32
    %c0_i32_0 = arith.constant 0 : i32
    %c0_i32_1 = arith.constant 0 : i32
    return %arg0, %c0_i32, %c0_i32_0 : i32, i32, i32
  }
}

</mosaic_0001>

<llo_original>
// kernel: tpu_custom_call.1
$region0: #{tpu_custom_call.1}
  #allocation0 [shape = 'u32[]', space=smem, size = 0x4, offset = 0x4, fixed_abs, tag = 'smem constant byte address 0x4 - core index']
  #allocation1 [shape = 'u32[144,128]{1,0:T(1,128)}', space=vmem, size = 0x12000, scoped, tag = 'internal scratch']
  #allocation2 [shape = 'bf16[112,4]{1,0:T(16,128)(2,1)}', space=vmem, size = 0x7000, scoped, tag = 'scratch operand']
  %s0 = inlined_call_operand.vmem [shape: f32[2,80,16], index: 0, kind: input, shape index: {}]
  %s1 = inlined_call_operand.vmem [shape: f32[80,1], index: 1, kind: input, shape index: {}]
  %s2 = inlined_call_operand.vmem [shape: bf16[16,4], index: 2, kind: input, shape index: {}]
  %s3 = inlined_call_operand.vmem [shape: f32[1,4], index: 3, kind: input, shape index: {}]
  %s4 = inlined_call_operand.vmem [shape: bf16[9,4,4], index: 4, kind: input, shape index: {}]
  %s5 = inlined_call_operand.vmem [shape: f32[1,4], index: 5, kind: input, shape index: {}]
  %s6 = inlined_call_operand.vmem [shape: bf16[4,16], index: 6, kind: input, shape index: {}]
  %s7 = inlined_call_operand.vmem [shape: f32[1,16], index: 7, kind: input, shape index: {}]
  %s8 = inlined_call_operand.vmem [shape: f32[2,80,16], index: 8, kind: output, shape index: {}]
  %s9 = sld [smem:[#allocation0]]
  $region65: #{tpu_custom_call.1} parent=0
    _
  %s11 = ssub.s32 1, %s9
  %s12 = scalar_select 0, %s11, %s9
  loop: start=0, step=1, limit=4
  $region2: #{tpu_custom_call.1} parent=0 // loop_pre_header
    _
  $region3: #{tpu_custom_call.1} parent=0 // loop_header
    %s14 = sphi 0, %s18
    %p15 = scmp.ge.s32.totalorder %s14, 4
    %s24 = sphi 0, %s26
    %s27 = sphi 0, %s24
    %s28 = sphi 0, %s27
    %s44 = sphi 0, %s28
    %s48 = sphi 0, %s48
    %s50 = sphi 0, %s48
    %s51 = sphi 0, %s50
    %s65 = sphi 0, %s51
    %s69 = sphi 0, %s69
    %s71 = sphi 0, %s69
    %s72 = sphi 0, %s71
    %s86 = sphi 0, %s72
    %s90 = sphi 0, %s90
    %s92 = sphi 0, %s90
    %s93 = sphi 0, %s92
    %s107 = sphi 0, %s93
    %s111 = sphi 0, %s111
    %s113 = sphi 0, %s111
    %s114 = sphi 0, %s113
    %s128 = sphi 0, %s114
    %s132 = sphi 0, %s132
    %s134 = sphi 0, %s132
    %s135 = sphi 0, %s134
    %s149 = sphi 0, %s135
    %s153 = sphi 0, %s153
    %s155 = sphi 0, %s153
    %s156 = sphi 0, %s155
    %s170 = sphi 0, %s156
    %s174 = sphi 0, %s174
    %s176 = sphi 0, %s174
    %s177 = sphi 0, %s176
    %s191 = sphi 0, %s177
    %s197 = sphi 0, %s199
    %s200 = sphi 0, %s197
    %s201 = sphi 0, %s200
    %s217 = sphi 0, %s201
  $region4: #{tpu_custom_call.1} parent=0 // loop_header_branch
    %17 = sbr.rel (%p15) target = $region8
  $region5: #{tpu_custom_call.1} parent=0 // loop_body
    %s19 = ssub.s32 %s14, 1
    %s20 = ssub.s32 %s14, 2
    %s21 = sadd.s32 %s14, 1
    %s22 = ssub.s32 %s14, %s21
    %p23 = scmp.eq.s32.totalorder %s22, 0
    %s25 = sadd.s32 %s24, 1
    %s26 = scalar_select %p23, %s24, %s25
    %p29 = pneg %p23
    %p30 = scmp.eq.s32.totalorder %s14, 1
    %p31 = por %p29, %p30
    %p32 = scmp.ne.s32.totalorder %s24, %s27
    %p33 = scmp.eq.s32.totalorder %s14, 0
    %p34 = por %p32, %p33
    %p35 = scmp.ne.s32.totalorder %s24, %s27
    %p36 = scmp.eq.s32.totalorder %s19, 1
    %p37 = por %p35, %p36
    %p38 = scmp.ne.s32.totalorder %s27, %s28
    %p39 = scmp.eq.s32.totalorder %s19, 0
    %p40 = por %p38, %p39
    %p41 = scmp.ne.s32.totalorder %s27, %s28
    %p42 = scmp.eq.s32.totalorder %s20, 1
    %p43 = por %p41, %p42
    %p45 = scmp.ne.s32.totalorder %s28, %s44
    %p46 = scmp.eq.s32.totalorder %s20, 0
    %p47 = por %p45, %p46
    %s49 = sadd.s32 %s48, 1
    %p52 = scmp.eq.s32.totalorder %s14, 1
    %p53 = scmp.ne.s32.totalorder %s48, %s50
    %p54 = scmp.eq.s32.totalorder %s14, 0
    %p55 = por %p53, %p54
    %p56 = scmp.ne.s32.totalorder %s48, %s50
    %p57 = scmp.eq.s32.totalorder %s19, 1
    %p58 = por %p56, %p57
    %p59 = scmp.ne.s32.totalorder %s50, %s51
    %p60 = scmp.eq.s32.totalorder %s19, 0
    %p61 = por %p59, %p60
    %p62 = scmp.ne.s32.totalorder %s50, %s51
    %p63 = scmp.eq.s32.totalorder %s20, 1
    %p64 = por %p62, %p63
    %p66 = scmp.ne.s32.totalorder %s51, %s65
    %p67 = scmp.eq.s32.totalorder %s20, 0
    %p68 = por %p66, %p67
    %s70 = sadd.s32 %s69, 1
    %p73 = scmp.eq.s32.totalorder %s14, 1
    %p74 = scmp.ne.s32.totalorder %s69, %s71
    %p75 = scmp.eq.s32.totalorder %s14, 0
    %p76 = por %p74, %p75
    %p77 = scmp.ne.s32.totalorder %s69, %s71
    %p78 = scmp.eq.s32.totalorder %s19, 1
    %p79 = por %p77, %p78
    %p80 = scmp.ne.s32.totalorder %s71, %s72
    %p81 = scmp.eq.s32.totalorder %s19, 0
    %p82 = por %p80, %p81
    %p83 = scmp.ne.s32.totalorder %s71, %s72
    %p84 = scmp.eq.s32.totalorder %s20, 1
    %p85 = por %p83, %p84
    %p87 = scmp.ne.s32.totalorder %s72, %s86
    %p88 = scmp.eq.s32.totalorder %s20, 0
    %p89 = por %p87, %p88
    %s91 = sadd.s32 %s90, 1
    %p94 = scmp.eq.s32.totalorder %s14, 1
    %p95 = scmp.ne.s32.totalorder %s90, %s92
    %p96 = scmp.eq.s32.totalorder %s14, 0
    %p97 = por %p95, %p96
    %p98 = scmp.ne.s32.totalorder %s90, %s92
    %p99 = scmp.eq.s32.totalorder %s19, 1
    %p100 = por %p98, %p99
    %p101 = scmp.ne.s32.totalorder %s92, %s93
    %p102 = scmp.eq.s32.totalorder %s19, 0
    %p103 = por %p101, %p102
    %p104 = scmp.ne.s32.totalorder %s92, %s93
    %p105 = scmp.eq.s32.totalorder %s20, 1
    %p106 = por %p104, %p105
    %p108 = scmp.ne.s32.totalorder %s93, %s107
    %p109 = scmp.eq.s32.totalorder %s20, 0
    %p110 = por %p108, %p109
    %s112 = sadd.s32 %s111, 1
    %p115 = scmp.eq.s32.totalorder %s14, 1
    %p116 = scmp.ne.s32.totalorder %s111, %s113
    %p117 = scmp.eq.s32.totalorder %s14, 0
    %p118 = por %p116, %p117
    %p119 = scmp.ne.s32.totalorder %s111, %s113
    %p120 = scmp.eq.s32.totalorder %s19, 1
    %p121 = por %p119, %p120
    %p122 = scmp.ne.s32.totalorder %s113, %s114
    %p123 = scmp.eq.s32.totalorder %s19, 0
    %p124 = por %p122, %p123
    %p125 = scmp.ne.s32.totalorder %s113, %s114
    %p126 = scmp.eq.s32.totalorder %s20, 1
    %p127 = por %p125, %p126
    %p129 = scmp.ne.s32.totalorder %s114, %s128
    %p130 = scmp.eq.s32.totalorder %s20, 0
    %p131 = por %p129, %p130
    %s133 = sadd.s32 %s132, 1
    %p136 = scmp.eq.s32.totalorder %s14, 1
    %p137 = scmp.ne.s32.totalorder %s132, %s134
    %p138 = scmp.eq.s32.totalorder %s14, 0
    %p139 = por %p137, %p138
    %p140 = scmp.ne.s32.totalorder %s132, %s134
    %p141 = scmp.eq.s32.totalorder %s19, 1
    %p142 = por %p140, %p141
    %p143 = scmp.ne.s32.totalorder %s134, %s135
    %p144 = scmp.eq.s32.totalorder %s19, 0
    %p145 = por %p143, %p144
    %p146 = scmp.ne.s32.totalorder %s134, %s135
    %p147 = scmp.eq.s32.totalorder %s20, 1
    %p148 = por %p146, %p147
    %p150 = scmp.ne.s32.totalorder %s135, %s149
    %p151 = scmp.eq.s32.totalorder %s20, 0
    %p152 = por %p150, %p151
    %s154 = sadd.s32 %s153, 1
    %p157 = scmp.eq.s32.totalorder %s14, 1
    %p158 = scmp.ne.s32.totalorder %s153, %s155
    %p159 = scmp.eq.s32.totalorder %s14, 0
    %p160 = por %p158, %p159
    %p161 = scmp.ne.s32.totalorder %s153, %s155
    %p162 = scmp.eq.s32.totalorder %s19, 1
    %p163 = por %p161, %p162
    %p164 = scmp.ne.s32.totalorder %s155, %s156
    %p165 = scmp.eq.s32.totalorder %s19, 0
    %p166 = por %p164, %p165
    %p167 = scmp.ne.s32.totalorder %s155, %s156
    %p168 = scmp.eq.s32.totalorder %s20, 1
    %p169 = por %p167, %p168
    %p171 = scmp.ne.s32.totalorder %s156, %s170
    %p172 = scmp.eq.s32.totalorder %s20, 0
    %p173 = por %p171, %p172
    %s175 = sadd.s32 %s174, 1
    %p178 = scmp.eq.s32.totalorder %s14, 1
    %p179 = scmp.ne.s32.totalorder %s174, %s176
    %p180 = scmp.eq.s32.totalorder %s14, 0
    %p181 = por %p179, %p180
    %p182 = scmp.ne.s32.totalorder %s174, %s176
    %p183 = scmp.eq.s32.totalorder %s19, 1
    %p184 = por %p182, %p183
    %p185 = scmp.ne.s32.totalorder %s176, %s177
    %p186 = scmp.eq.s32.totalorder %s19, 0
    %p187 = por %p185, %p186
    %p188 = scmp.ne.s32.totalorder %s176, %s177
    %p189 = scmp.eq.s32.totalorder %s20, 1
    %p190 = por %p188, %p189
    %p192 = scmp.ne.s32.totalorder %s177, %s191
    %p193 = scmp.eq.s32.totalorder %s20, 0
    %p194 = por %p192, %p193
    %s195 = ssub.s32 %s14, %s21
    %p196 = scmp.eq.s32.totalorder %s195, 0
    %s198 = sadd.s32 %s197, 1
    %s199 = scalar_select %p196, %s197, %s198
    %p202 = pneg %p196
    %p203 = scmp.eq.s32.totalorder %s14, 1
    %p204 = por %p202, %p203
    %p205 = scmp.ne.s32.totalorder %s197, %s200
    %p206 = scmp.eq.s32.totalorder %s14, 0
    %p207 = por %p205, %p206
    %p208 = scmp.ne.s32.totalorder %s197, %s200
    %p209 = scmp.eq.s32.totalorder %s19, 1
    %p210 = por %p208, %p209
    %p211 = scmp.ne.s32.totalorder %s200, %s201
    %p212 = scmp.eq.s32.totalorder %s19, 0
    %p213 = por %p211, %p212
    %p214 = scmp.ne.s32.totalorder %s200, %s201
    %p215 = scmp.eq.s32.totalorder %s20, 1
    %p216 = por %p214, %p215
    %p218 = scmp.ne.s32.totalorder %s201, %s217
    %p219 = scmp.eq.s32.totalorder %s20, 0
    %p220 = por %p218, %p219
    %p221 = scmp.le.s32.totalorder 1, %s14
    %p222 = scmp.lt.s32.totalorder %s14, 3
    %p223 = pnand %p221, %p222
    %p224 = pneg %p223
    // Predicated region
    $region9: #{tpu_custom_call.1} parent=5 // pred_check
      _
    $region10: #{tpu_custom_call.1} parent=5 // pred_check_branch
      %226 = sbr.rel (%p223) target = $region12
    $region11: #{tpu_custom_call.1} parent=5 // pred_region
      %s227 = ssub.s32 %s14, 1
      // Predicated region
      $region13: #{tpu_custom_call.1} parent=11 // pred_check
        %p228 = pneg %p61
      $region14: #{tpu_custom_call.1} parent=11 // pred_check_branch
        %230 = sbr.rel (%p228) target = $region16
      $region15: #{tpu_custom_call.1} parent=11 // pred_region
        _
      $region16: #{tpu_custom_call.1} parent=11 // pred_fallthru
        _
      // Predicated region
      $region17: #{tpu_custom_call.1} parent=11 // pred_check
        %p231 = pneg %p82
      $region18: #{tpu_custom_call.1} parent=11 // pred_check_branch
        %233 = sbr.rel (%p231) target = $region20
      $region19: #{tpu_custom_call.1} parent=11 // pred_region
        _
      $region20: #{tpu_custom_call.1} parent=11 // pred_fallthru
        _
      // Predicated region
      $region21: #{tpu_custom_call.1} parent=11 // pred_check
        %p234 = pneg %p103
      $region22: #{tpu_custom_call.1} parent=11 // pred_check_branch
        %236 = sbr.rel (%p234) target = $region24
      $region23: #{tpu_custom_call.1} parent=11 // pred_region
        _
      $region24: #{tpu_custom_call.1} parent=11 // pred_fallthru
        _
      // Predicated region
      $region25: #{tpu_custom_call.1} parent=11 // pred_check
        %p237 = pneg %p124
      $region26: #{tpu_custom_call.1} parent=11 // pred_check_branch
        %239 = sbr.rel (%p237) target = $region28
      $region27: #{tpu_custom_call.1} parent=11 // pred_region
        _
      $region28: #{tpu_custom_call.1} parent=11 // pred_fallthru
        _
      // Predicated region
      $region29: #{tpu_custom_call.1} parent=11 // pred_check
        %p240 = pneg %p145
      $region30: #{tpu_custom_call.1} parent=11 // pred_check_branch
        %242 = sbr.rel (%p240) target = $region32
      $region31: #{tpu_custom_call.1} parent=11 // pred_region
        _
      $region32: #{tpu_custom_call.1} parent=11 // pred_fallthru
        _
      // Predicated region
      $region33: #{tpu_custom_call.1} parent=11 // pred_check
        %p243 = pneg %p166
      $region34: #{tpu_custom_call.1} parent=11 // pred_check_branch
        %245 = sbr.rel (%p243) target = $region36
      $region35: #{tpu_custom_call.1} parent=11 // pred_region
        _
      $region36: #{tpu_custom_call.1} parent=11 // pred_fallthru
        _
      // Predicated region
      $region37: #{tpu_custom_call.1} parent=11 // pred_check
        %p246 = pneg %p187
      $region38: #{tpu_custom_call.1} parent=11 // pred_check_branch
        %248 = sbr.rel (%p246) target = $region40
      $region39: #{tpu_custom_call.1} parent=11 // pred_region
        _
      $region40: #{tpu_custom_call.1} parent=11 // pred_fallthru
        _
    $region12: #{tpu_custom_call.1} parent=5 // pred_fallthru
      _
    %p249 = scmp.lt.s32.totalorder %s14, 2
    // Predicated region
    $region41: #{tpu_custom_call.1} parent=5 // pred_check
      %p250 = pneg %p249
    $region42: #{tpu_custom_call.1} parent=5 // pred_check_branch
      %252 = sbr.rel (%p250) target = $region44
    $region43: #{tpu_custom_call.1} parent=5 // pred_region
      // Predicated region
      $region45: #{tpu_custom_call.1} parent=43 // pred_check
        %p253 = pneg %p34
      $region46: #{tpu_custom_call.1} parent=43 // pred_check_branch
        %255 = sbr.rel (%p253) target = $region48
      $region47: #{tpu_custom_call.1} parent=43 // pred_region
        %p256 = scmp.lt.s32.totalorder %s14, 1
        %s257 = scalar_select %p256, %s14, 1
        %s258 = smul.addr %s257, 10
        %s259 = smul.addr %s258, 8
        %s260 = scalar_lea.vmem %s0, %s259
      $region48: #{tpu_custom_call.1} parent=43 // pred_fallthru
        _
    $region44: #{tpu_custom_call.1} parent=5 // pred_fallthru
      _
    %p261 = scmp.le.s32.totalorder 1, %s14
    %p262 = scmp.lt.s32.totalorder %s14, 3
    %p263 = pnand %p261, %p262
    %p264 = pneg %p263
    // Predicated region
    $region49: #{tpu_custom_call.1} parent=5 // pred_check
      _
    $region50: #{tpu_custom_call.1} parent=5 // pred_check_branch
      %266 = sbr.rel (%p263) target = $region52
    $region51: #{tpu_custom_call.1} parent=5 // pred_region
      %s267 = ssub.s32 %s14, 1
      %p268 = scmp.lt.s32.totalorder %s19, 1
      %s269 = scalar_select %p268, %s19, 1
      %s270 = smul.addr %s269, 10
      %s271 = smul.addr %s270, 8
      %s272 = scalar_lea.vmem %s0, %s271
      %p273 = pneg %p40
      %p274 = pneg %p37
      %p275 = pneg %p61
      %p276 = pneg %p58
      %p277 = pneg %p82
      %p278 = pneg %p79
      %p279 = pneg %p103
      %p280 = pneg %p100
      %p281 = pneg %p124
      %p282 = pneg %p121
      %p283 = pneg %p145
      %p284 = pneg %p142
      %p285 = pneg %p166
      %p286 = pneg %p163
      %p287 = pneg %p187
      %p288 = pneg %p184
      %p289 = pneg %p213
      %p290 = pneg %p210
      %p291 = scmp.lt.s32.totalorder %s19, 1
      %s292 = scalar_select %p291, %s19, 1
      %s293 = smul.addr %s292, 10
      %s294 = smul.addr %s293, 8
      %s295 = scalar_lea.vmem %s8, %s294
      %p296 = scmp.lt.s32.totalorder %s19, 1
      %s297 = scalar_select %p296, %s19, 1
      %s298 = smul.addr %s297, 10
      %s299 = smul.addr %s298, 8
      %s300 = scalar_lea.vmem %s0, %s299
      %p301 = scmp.lt.s32.totalorder %s19, 1
      %s302 = scalar_select %p301, %s19, 1
      %s303 = smul.addr %s302, 10
      %s304 = smul.addr %s303, 8
      %s305 = scalar_lea.vmem %s8, %s304
      %vm307 = vcmask 31744
      %308 = vst.msk [vmem:[#allocation2] sm:$0xff] %vm307, 0
      %309 = vst.msk [vmem:[#allocation2 + $0x30] sm:$0xff] %vm307, 0
      %v310 = vld [vmem:[%s300] sm:$0xff]
      %v311 = vld [vmem:[%s300 + $0x8] sm:$0xff]
      %v312 = vld [vmem:[%s300 + $0x10] sm:$0xff]
      %v313 = vld [vmem:[%s300 + $0x18] sm:$0xff]
      %v314 = vld [vmem:[%s300 + $0x20] sm:$0xff]
      %v315 = vld [vmem:[%s300 + $0x28] sm:$0xff]
      %v316 = vld [vmem:[%s300 + $0x30] sm:$0xff]
      %v317 = vld [vmem:[%s300 + $0x38] sm:$0xff]
      %v318 = vld [vmem:[%s300 + $0x40] sm:$0xff]
      %v319 = vld [vmem:[%s300 + $0x48] sm:$0xff]
      %v320 = vpack.c.bf16 %v311, %v310
      %v321 = vpack.c.bf16 %v313, %v312
      %v322 = vpack.c.bf16 %v315, %v314
      %v323 = vpack.c.bf16 %v317, %v316
      %v324 = vpack.c.bf16 %v319, %v318
      %v325 = vld [vmem:[%s2] sm:$0xf]
      %v326 = vld [vmem:[%s2 + $0x4] sm:$0xf]
      %v327 = vld [vmem:[%s3] sm:$0x1]
      %v329 = vlaneseq
      %v330 = vshrl.u32 %v329, 7
      %v331 = vsub.s32 0, %v330
      %v332 = vrot.slane %v327, %v331
      %v336 = vunpack.c.l.b16 %v325
      %v337 = vunpack.c.l.b16 %v326
      %v338 = vpack.c.b16 %v337, %v336
      %vm340 = vcmask 130048
      %v342 = vsel %vm340, %v320, 0
      %v345 = vsel %vm340, %v321, 0
      %v348 = vsel %vm340, %v322, 0
      %v351 = vsel %vm340, %v323, 0
      %v354 = vsel %vm340, %v324, 0
      %356 = vmatprep.subr.bf16.mxu0 0
      %357 = vmatpush1.bf16.msra.mxu0 %v338
      %358 = vmatprep.subr.bf16.mxu0 0
      %359 = vmatpush1.bf16.msra.mxu0 0
      %360 = vmatprep.subr.bf16.mxu0 0
      %361 = vmatpush1.bf16.msra.mxu0 0
      %362 = vmatprep.subr.bf16.mxu0 0
      %363 = vmatpush1.bf16.msra.mxu0 0
      %364 = vmatprep.subr.bf16.mxu0 0
      %365 = vmatpush1.bf16.msra.mxu0 0
      %366 = vmatprep.subr.bf16.mxu0 0
      %367 = vmatpush1.bf16.msra.mxu0 0
      %368 = vmatprep.subr.bf16.mxu0 0
      %369 = vmatpush1.bf16.msra.mxu0 0
      %370 = vmatprep.subr.bf16.mxu0 0
      %371 = vmatpush1.bf16.msra.mxu0 0
      %372 = vmatprep.subr.bf16.mxu0 0
      %373 = vmatpush1.bf16.msra.mxu0 0
      %374 = vmatprep.subr.bf16.mxu0 0
      %375 = vmatpush1.bf16.msra.mxu0 0
      %376 = vmatprep.subr.bf16.mxu0 0
      %377 = vmatpush1.bf16.msra.mxu0 0
      %378 = vmatprep.subr.bf16.mxu0 0
      %379 = vmatpush1.bf16.msra.mxu0 0
      %380 = vmatprep.subr.bf16.mxu0 0
      %381 = vmatpush1.bf16.msra.mxu0 0
      %382 = vmatprep.subr.bf16.mxu0 0
      %383 = vmatpush1.bf16.msra.mxu0 0
      %384 = vmatprep.subr.bf16.mxu0 0
      %385 = vmatpush1.bf16.msra.mxu0 0
      %386 = vmatprep.subr.bf16.mxu0 0
      %387 = vmatpush1.bf16.msra.mxu0 0
      %388 = vmatprep.mubr.bf16.mxu0 0
      %389 = vmatmul.mubr.bf16.gmra.mrb[0].mxu0 %v342
      %v390 = vpop.f32.mrb[0].mxu0
      %v391 = vadd.f32 %v332, %v390
      %v392 = vpop.f32.mrb[0].mxu0
      %v393 = vpop.f32.mrb[0].mxu0
      %v394 = vadd.f32 %v332, %v393
      %v395 = vpop.f32.mrb[0].mxu0
      %396 = vmatprep.mubr.bf16.mxu0 0
      %397 = vmatmul.mubr.bf16.gmra.mrb[0].mxu0 %v345
      %v398 = vpop.f32.mrb[0].mxu0
      %v399 = vadd.f32 %v332, %v398
      %v400 = vpop.f32.mrb[0].mxu0
      %v401 = vpop.f32.mrb[0].mxu0
      %v402 = vadd.f32 %v332, %v401
      %v403 = vpop.f32.mrb[0].mxu0
      %404 = vmatprep.mubr.bf16.mxu0 0
      %405 = vmatmul.mubr.bf16.gmra.mrb[0].mxu0 %v348
      %v406 = vpop.f32.mrb[0].mxu0
      %v407 = vadd.f32 %v332, %v406
      %v408 = vpop.f32.mrb[0].mxu0
      %v409 = vpop.f32.mrb[0].mxu0
      %v410 = vadd.f32 %v332, %v409
      %v411 = vpop.f32.mrb[0].mxu0
      %412 = vmatprep.mubr.bf16.mxu0 0
      %413 = vmatmul.mubr.bf16.gmra.mrb[0].mxu0 %v351
      %v414 = vpop.f32.mrb[0].mxu0
      %v415 = vadd.f32 %v332, %v414
      %v416 = vpop.f32.mrb[0].mxu0
      %v417 = vpop.f32.mrb[0].mxu0
      %v418 = vadd.f32 %v332, %v417
      %v419 = vpop.f32.mrb[0].mxu0
      %420 = vmatprep.mubr.bf16.mxu0 0
      %421 = vmatmul.mubr.bf16.gmra.mrb[0].mxu0 %v354
      %v422 = vpop.f32.mrb[0].mxu0
      %v423 = vadd.f32 %v332, %v422
      %v424 = vpop.f32.mrb[0].mxu0
      %v425 = vpop.f32.mrb[0].mxu0
      %v426 = vadd.f32 %v332, %v425
      %v427 = vpop.f32.mrb[0].mxu0
      %428 = vdwg.mxu0
      %v429 = vmax.f32 %v391, 0.0
      %v430 = vmax.f32 %v394, 0.0
      %v431 = vmax.f32 %v399, 0.0
      %v432 = vmax.f32 %v402, 0.0
      %v433 = vmax.f32 %v407, 0.0
      %v434 = vmax.f32 %v410, 0.0
      %v435 = vmax.f32 %v415, 0.0
      %v436 = vmax.f32 %v418, 0.0
      %v437 = vmax.f32 %v423, 0.0
      %v438 = vmax.f32 %v426, 0.0
      %v439 = vld [vmem:[%s1] sm:$0xff]
      %v440 = vld [vmem:[%s1 + $0x8] sm:$0xff]
      %v441 = vld [vmem:[%s1 + $0x10] sm:$0xff]
      %v442 = vld [vmem:[%s1 + $0x18] sm:$0xff]
      %v443 = vld [vmem:[%s1 + $0x20] sm:$0xff]
      %v444 = vld [vmem:[%s1 + $0x28] sm:$0xff]
      %v445 = vld [vmem:[%s1 + $0x30] sm:$0xff]
      %v446 = vld [vmem:[%s1 + $0x38] sm:$0xff]
      %v447 = vld [vmem:[%s1 + $0x40] sm:$0xff]
      %v448 = vld [vmem:[%s1 + $0x48] sm:$0xff]
      %450 = vset.pattern.permute.xlu0 0
      %451 = vperm.xlu0 %450, %v439
      %v452 = vpop.permute.xlu0 %451
      %455 = vset.pattern.permute.xlu0 0
      %456 = vperm.xlu0 %455, %v440
      %v457 = vpop.permute.xlu0 %456
      %460 = vset.pattern.permute.xlu0 0
      %461 = vperm.xlu0 %460, %v441
      %v462 = vpop.permute.xlu0 %461
      %465 = vset.pattern.permute.xlu0 0
      %466 = vperm.xlu0 %465, %v442
      %v467 = vpop.permute.xlu0 %466
      %470 = vset.pattern.permute.xlu0 0
      %471 = vperm.xlu0 %470, %v443
      %v472 = vpop.permute.xlu0 %471
      %475 = vset.pattern.permute.xlu0 0
      %476 = vperm.xlu0 %475, %v444
      %v477 = vpop.permute.xlu0 %476
      %480 = vset.pattern.permute.xlu0 0
      %481 = vperm.xlu0 %480, %v445
      %v482 = vpop.permute.xlu0 %481
      %485 = vset.pattern.permute.xlu0 0
      %486 = vperm.xlu0 %485, %v446
      %v487 = vpop.permute.xlu0 %486
      %490 = vset.pattern.permute.xlu0 0
      %491 = vperm.xlu0 %490, %v447
      %v492 = vpop.permute.xlu0 %491
      %495 = vset.pattern.permute.xlu0 0
      %496 = vperm.xlu0 %495, %v448
      %v497 = vpop.permute.xlu0 %496
      %v499 = vmul.f32 %v429, %v452
      %v500 = vmul.f32 %v430, %v457
      %v501 = vmul.f32 %v431, %v462
      %v502 = vmul.f32 %v432, %v467
      %v503 = vmul.f32 %v433, %v472
      %v504 = vmul.f32 %v434, %v477
      %v505 = vmul.f32 %v435, %v482
      %v506 = vmul.f32 %v436, %v487
      %v507 = vmul.f32 %v437, %v492
      %v508 = vmul.f32 %v438, %v497
      %v509 = vpack.c.bf16 %v500, %v499
      %v510 = vpack.c.bf16 %v502, %v501
      %v511 = vpack.c.bf16 %v504, %v503
      %v512 = vpack.c.bf16 %v506, %v505
      %v513 = vpack.c.bf16 %v508, %v507
      %514 = vst.msk [vmem:[#allocation2 + $0x8] sm:$0xff] %vm307, %v509
      %515 = vst.msk [vmem:[#allocation2 + $0x10] sm:$0xff] %vm307, %v510
      %516 = vst.msk [vmem:[#allocation2 + $0x18] sm:$0xff] %vm307, %v511
      %517 = vst.msk [vmem:[#allocation2 + $0x20] sm:$0xff] %vm307, %v512
      %518 = vst.msk [vmem:[#allocation2 + $0x28] sm:$0xff] %vm307, %v513
      %v519 = vld [vmem:[#allocation2] sm:$0xfc]
      %v520 = vld [vmem:[#allocation2 + $0x8] sm:$0xff]
      %v521 = vld [vmem:[#allocation2 + $0x10] sm:$0xff]
      %v522 = vld [vmem:[#allocation2 + $0x18] sm:$0xff]
      %v523 = vld [vmem:[#allocation2 + $0x20] sm:$0xff]
      %v524 = vld [vmem:[#allocation2 + $0x28] sm:$0x7]
      %v525 = vld [vmem:[%s4] sm:$0x3]
      %v526 = vld [vmem:[#allocation2] sm:$0xf8]
      %s527 = scalar_lea.vmem %s4, 2
      %v528 = vld [vmem:[%s527] sm:$0x3]
      %vm535 = vcmask 1044480
      %v536 = vrot.slane %v526, 3
      %v537 = vrot.slane %v520, 3
      %v538 = vsel %vm535, %v536, %v537
      %v539 = vrot.slane %v521, 3
      %v540 = vsel %vm535, %v537, %v539
      %v541 = vrot.slane %v522, 3
      %v542 = vsel %vm535, %v539, %v541
      %v543 = vrot.slane %v523, 3
      %v544 = vsel %vm535, %v541, %v543
      %v545 = vrot.slane %v524, 3
      %v546 = vsel %vm535, %v543, %v545
      %v548 = vsel %vm307, %v538, 0
      %v551 = vsel %vm307, %v540, 0
      %v554 = vsel %vm307, %v542, 0
      %v557 = vsel %vm307, %v544, 0
      %v560 = vsel %vm307, %v546, 0
      %vm562 = vcmask 1041408
      %v564 = vsel %vm562, %v528, 0
      %566 = vmatprep.subr.bf16.mxu0 0
      %567 = vmatpush1.bf16.msra.mxu0 %v564
      %568 = vmatprep.subr.bf16.mxu0 0
      %569 = vmatpush1.bf16.msra.mxu0 0
      %570 = vmatprep.subr.bf16.mxu0 0
      %571 = vmatpush1.bf16.msra.mxu0 0
      %572 = vmatprep.subr.bf16.mxu0 0
      %573 = vmatpush1.bf16.msra.mxu0 0
      %574 = vmatprep.subr.bf16.mxu0 0
      %575 = vmatpush1.bf16.msra.mxu0 0
      %576 = vmatprep.subr.bf16.mxu0 0
      %577 = vmatpush1.bf16.msra.mxu0 0
      %578 = vmatprep.subr.bf16.mxu0 0
      %579 = vmatpush1.bf16.msra.mxu0 0
      %580 = vmatprep.subr.bf16.mxu0 0
      %581 = vmatpush1.bf16.msra.mxu0 0
      %582 = vmatprep.subr.bf16.mxu0 0
      %583 = vmatpush1.bf16.msra.mxu0 0
      %584 = vmatprep.subr.bf16.mxu0 0
      %585 = vmatpush1.bf16.msra.mxu0 0
      %586 = vmatprep.subr.bf16.mxu0 0
      %587 = vmatpush1.bf16.msra.mxu0 0
      %588 = vmatprep.subr.bf16.mxu0 0
      %589 = vmatpush1.bf16.msra.mxu0 0
      %590 = vmatprep.subr.bf16.mxu0 0
      %591 = vmatpush1.bf16.msra.mxu0 0
      %592 = vmatprep.subr.bf16.mxu0 0
      %593 = vmatpush1.bf16.msra.mxu0 0
      %594 = vmatprep.subr.bf16.mxu0 0
      %595 = vmatpush1.bf16.msra.mxu0 0
      %596 = vmatprep.subr.bf16.mxu0 0
      %597 = vmatpush1.bf16.msra.mxu0 0
      %598 = vmatprep.mubr.bf16.mxu0 0
      %599 = vmatmul.mubr.bf16.gmra.mrb[0].mxu0 %v548
      %v600 = vpop.f32.mrb[0].mxu0
      %v601 = vadd.f32 0.0, %v600
      %v602 = vpop.f32.mrb[0].mxu0
      %v603 = vpop.f32.mrb[0].mxu0
      %v604 = vadd.f32 0.0, %v603
      %v605 = vpop.f32.mrb[0].mxu0
      %606 = vmatprep.mubr.bf16.mxu0 0
      %607 = vmatmul.mubr.bf16.gmra.mrb[0].mxu0 %v551
      %v608 = vpop.f32.mrb[0].mxu0
      %v609 = vadd.f32 0.0, %v608
      %v610 = vpop.f32.mrb[0].mxu0
      %v611 = vpop.f32.mrb[0].mxu0
      %v612 = vadd.f32 0.0, %v611
      %v613 = vpop.f32.mrb[0].mxu0
      %614 = vmatprep.mubr.bf16.mxu0 0
      %615 = vmatmul.mubr.bf16.gmra.mrb[0].mxu0 %v554
      %v616 = vpop.f32.mrb[0].mxu0
      %v617 = vadd.f32 0.0, %v616
      %v618 = vpop.f32.mrb[0].mxu0
      %v619 = vpop.f32.mrb[0].mxu0
      %v620 = vadd.f32 0.0, %v619
      %v621 = vpop.f32.mrb[0].mxu0
      %622 = vmatprep.mubr.bf16.mxu0 0
      %623 = vmatmul.mubr.bf16.gmra.mrb[0].mxu0 %v557
      %v624 = vpop.f32.mrb[0].mxu0
      %v625 = vadd.f32 0.0, %v624
      %v626 = vpop.f32.mrb[0].mxu0
      %v627 = vpop.f32.mrb[0].mxu0
      %v628 = vadd.f32 0.0, %v627
      %v629 = vpop.f32.mrb[0].mxu0
      %630 = vmatprep.mubr.bf16.mxu0 0
      %631 = vmatmul.mubr.bf16.gmra.mrb[0].mxu0 %v560
      %v632 = vpop.f32.mrb[0].mxu0
      %v633 = vadd.f32 0.0, %v632
      %v634 = vpop.f32.mrb[0].mxu0
      %v635 = vpop.f32.mrb[0].mxu0
      %v636 = vadd.f32 0.0, %v635
      %v637 = vpop.f32.mrb[0].mxu0
      %638 = vdwg.mxu0
      %vm639 = vsmask.f32 5376
      %v641 = vshrl.u32 %v519, 16
      %v643 = vrot.slane %v641, 2
      %v644 = vshll.u32 %v519, 16
      %v646 = vrot.slane %v644, 3
      %v647 = vor.u32 %v643, %v646
      %v649 = vshrl.u32 %v520, 16
      %v651 = vrot.slane %v649, 2
      %v652 = vshll.u32 %v520, 16
      %v654 = vrot.slane %v652, 3
      %v655 = vor.u32 %v651, %v654
      %v656 = vsel %vm639, %v647, %v655
      %v658 = vshrl.u32 %v521, 16
      %v660 = vrot.slane %v658, 2
      %v661 = vshll.u32 %v521, 16
      %v663 = vrot.slane %v661, 3
      %v664 = vor.u32 %v660, %v663
      %v665 = vsel %vm639, %v655, %v664
      %v667 = vshrl.u32 %v522, 16
      %v669 = vrot.slane %v667, 2
      %v670 = vshll.u32 %v522, 16
      %v672 = vrot.slane %v670, 3
      %v673 = vor.u32 %v669, %v672
      %v674 = vsel %vm639, %v664, %v673
      %v676 = vshrl.u32 %v523, 16
      %v678 = vrot.slane %v676, 2
      %v679 = vshll.u32 %v523, 16
      %v681 = vrot.slane %v679, 3
      %v682 = vor.u32 %v678, %v681
      %v683 = vsel %vm639, %v673, %v682
      %v685 = vshrl.u32 %v524, 16
      %v687 = vrot.slane %v685, 2
      %v688 = vshll.u32 %v524, 16
      %v690 = vrot.slane %v688, 3
      %v691 = vor.u32 %v687, %v690
      %v692 = vsel %vm639, %v682, %v691
      %v694 = vsel %vm307, %v656, 0
      %v697 = vsel %vm307, %v665, 0
      %v700 = vsel %vm307, %v674, 0
      %v703 = vsel %vm307, %v683, 0
      %v706 = vsel %vm307, %v692, 0
      %v709 = vsel %vm562, %v525, 0
      %711 = vmatprep.subr.bf16.mxu0 0
      %712 = vmatpush1.bf16.msra.mxu0 %v709
      %713 = vmatprep.subr.bf16.mxu0 0
      %714 = vmatpush1.bf16.msra.mxu0 0
      %715 = vmatprep.subr.bf16.mxu0 0
      %716 = vmatpush1.bf16.msra.mxu0 0
      %717 = vmatprep.subr.bf16.mxu0 0
      %718 = vmatpush1.bf16.msra.mxu0 0
      %719 = vmatprep.subr.bf16.mxu0 0
      %720 = vmatpush1.bf16.msra.mxu0 0
      %721 = vmatprep.subr.bf16.mxu0 0
      %722 = vmatpush1.bf16.msra.mxu0 0
      %723 = vmatprep.subr.bf16.mxu0 0
      %724 = vmatpush1.bf16.msra.mxu0 0
      %725 = vmatprep.subr.bf16.mxu0 0
      %726 = vmatpush1.bf16.msra.mxu0 0
      %727 = vmatprep.subr.bf16.mxu0 0
      %728 = vmatpush1.bf16.msra.mxu0 0
      %729 = vmatprep.subr.bf16.mxu0 0
      %730 = vmatpush1.bf16.msra.mxu0 0
      %731 = vmatprep.subr.bf16.mxu0 0
      %732 = vmatpush1.bf16.msra.mxu0 0
      %733 = vmatprep.subr.bf16.mxu0 0
      %734 = vmatpush1.bf16.msra.mxu0 0
      %735 = vmatprep.subr.bf16.mxu0 0
      %736 = vmatpush1.bf16.msra.mxu0 0
      %737 = vmatprep.subr.bf16.mxu0 0
      %738 = vmatpush1.bf16.msra.mxu0 0
      %739 = vmatprep.subr.bf16.mxu0 0
      %740 = vmatpush1.bf16.msra.mxu0 0
      %741 = vmatprep.subr.bf16.mxu0 0
      %742 = vmatpush1.bf16.msra.mxu0 0
      %743 = vmatprep.mubr.bf16.mxu0 0
      %744 = vmatmul.mubr.bf16.gmra.mrb[0].mxu0 %v694
      %v745 = vpop.f32.mrb[0].mxu0
      %v746 = vadd.f32 %v601, %v745
      %v747 = vpop.f32.mrb[0].mxu0
      %v748 = vpop.f32.mrb[0].mxu0
      %v749 = vadd.f32 %v604, %v748
      %v750 = vpop.f32.mrb[0].mxu0
      %751 = vmatprep.mubr.bf16.mxu0 0
      %752 = vmatmul.mubr.bf16.gmra.mrb[0].mxu0 %v697
      %v753 = vpop.f32.mrb[0].mxu0
      %v754 = vadd.f32 %v609, %v753
      %v755 = vpop.f32.mrb[0].mxu0
      %v756 = vpop.f32.mrb[0].mxu0
      %v757 = vadd.f32 %v612, %v756
      %v758 = vpop.f32.mrb[0].mxu0
      %759 = vmatprep.mubr.bf16.mxu0 0
      %760 = vmatmul.mubr.bf16.gmra.mrb[0].mxu0 %v700
      %v761 = vpop.f32.mrb[0].mxu0
      %v762 = vadd.f32 %v617, %v761
      %v763 = vpop.f32.mrb[0].mxu0
      %v764 = vpop.f32.mrb[0].mxu0
      %v765 = vadd.f32 %v620, %v764
      %v766 = vpop.f32.mrb[0].mxu0
      %767 = vmatprep.mubr.bf16.mxu0 0
      %768 = vmatmul.mubr.bf16.gmra.mrb[0].mxu0 %v703
      %v769 = vpop.f32.mrb[0].mxu0
      %v770 = vadd.f32 %v625, %v769
      %v771 = vpop.f32.mrb[0].mxu0
      %v772 = vpop.f32.mrb[0].mxu0
      %v773 = vadd.f32 %v628, %v772
      %v774 = vpop.f32.mrb[0].mxu0
      %775 = vmatprep.mubr.bf16.mxu0 0
      %776 = vmatmul.mubr.bf16.gmra.mrb[0].mxu0 %v706
      %v777 = vpop.f32.mrb[0].mxu0
      %v778 = vadd.f32 %v633, %v777
      %v779 = vpop.f32.mrb[0].mxu0
      %v780 = vpop.f32.mrb[0].mxu0
      %v781 = vadd.f32 %v636, %v780
      %v782 = vpop.f32.mrb[0].mxu0
      %783 = vdwg.mxu0
      %v784 = vld [vmem:[#allocation2 + $0x28] sm:$0xf]
      %s785 = scalar_lea.vmem %s4, 4
      %v786 = vld [vmem:[%s785] sm:$0x3]
      %vm787 = vsmask.f32 4352
      %v789 = vshrl.u32 %v526, 16
      %v791 = vrot.slane %v789, 3
      %v792 = vshll.u32 %v526, 16
      %v794 = vrot.slane %v792, 4
      %v795 = vor.u32 %v791, %v794
      %v796 = vrot.slane %v649, 3
      %v797 = vrot.slane %v652, 4
      %v798 = vor.u32 %v796, %v797
      %v799 = vsel %vm787, %v795, %v798
      %v800 = vrot.slane %v658, 3
      %v801 = vrot.slane %v661, 4
      %v802 = vor.u32 %v800, %v801
      %v803 = vsel %vm787, %v798, %v802
      %v804 = vrot.slane %v667, 3
      %v805 = vrot.slane %v670, 4
      %v806 = vor.u32 %v804, %v805
      %v807 = vsel %vm787, %v802, %v806
      %v808 = vrot.slane %v676, 3
      %v809 = vrot.slane %v679, 4
      %v810 = vor.u32 %v808, %v809
      %v811 = vsel %vm787, %v806, %v810
      %v813 = vshrl.u32 %v784, 16
      %v815 = vrot.slane %v813, 3
      %v816 = vshll.u32 %v784, 16
      %v818 = vrot.slane %v816, 4
      %v819 = vor.u32 %v815, %v818
      %v820 = vsel %vm787, %v810, %v819
      %v822 = vsel %vm307, %v799, 0
      %v825 = vsel %vm307, %v803, 0
      %v828 = vsel %vm307, %v807, 0
      %v831 = vsel %vm307, %v811, 0
      %v834 = vsel %vm307, %v820, 0
      %v837 = vsel %vm562, %v786, 0
      %839 = vmatprep.subr.bf16.mxu0 0
      %840 = vmatpush1.bf16.msra.mxu0 %v837
      %841 = vmatprep.subr.bf16.mxu0 0
      %842 = vmatpush1.bf16.msra.mxu0 0
      %843 = vmatprep.subr.bf16.mxu0 0
      %844 = vmatpush1.bf16.msra.mxu0 0
      %845 = vmatprep.subr.bf16.mxu0 0
      %846 = vmatpush1.bf16.msra.mxu0 0
      %847 = vmatprep.subr.bf16.mxu0 0
      %848 = vmatpush1.bf16.msra.mxu0 0
      %849 = vmatprep.subr.bf16.mxu0 0
      %850 = vmatpush1.bf16.msra.mxu0 0
      %851 = vmatprep.subr.bf16.mxu0 0
      %852 = vmatpush1.bf16.msra.mxu0 0
      %853 = vmatprep.subr.bf16.mxu0 0
      %854 = vmatpush1.bf16.msra.mxu0 0
      %855 = vmatprep.subr.bf16.mxu0 0
      %856 = vmatpush1.bf16.msra.mxu0 0
      %857 = vmatprep.subr.bf16.mxu0 0
      %858 = vmatpush1.bf16.msra.mxu0 0
      %859 = vmatprep.subr.bf16.mxu0 0
      %860 = vmatpush1.bf16.msra.mxu0 0
      %861 = vmatprep.subr.bf16.mxu0 0
      %862 = vmatpush1.bf16.msra.mxu0 0
      %863 = vmatprep.subr.bf16.mxu0 0
      %864 = vmatpush1.bf16.msra.mxu0 0
      %865 = vmatprep.subr.bf16.mxu0 0
      %866 = vmatpush1.bf16.msra.mxu0 0
      %867 = vmatprep.subr.bf16.mxu0 0
      %868 = vmatpush1.bf16.msra.mxu0 0
      %869 = vmatprep.subr.bf16.mxu0 0
      %870 = vmatpush1.bf16.msra.mxu0 0
      %871 = vmatprep.mubr.bf16.mxu0 0
      %872 = vmatmul.mubr.bf16.gmra.mrb[0].mxu0 %v822
      %v873 = vpop.f32.mrb[0].mxu0
      %v874 = vadd.f32 0.0, %v873
      %v875 = vpop.f32.mrb[0].mxu0
      %v876 = vpop.f32.mrb[0].mxu0
      %v877 = vadd.f32 0.0, %v876
      %v878 = vpop.f32.mrb[0].mxu0
      %879 = vmatprep.mubr.bf16.mxu0 0
      %880 = vmatmul.mubr.bf16.gmra.mrb[0].mxu0 %v825
      %v881 = vpop.f32.mrb[0].mxu0
      %v882 = vadd.f32 0.0, %v881
      %v883 = vpop.f32.mrb[0].mxu0
      %v884 = vpop.f32.mrb[0].mxu0
      %v885 = vadd.f32 0.0, %v884
      %v886 = vpop.f32.mrb[0].mxu0
      %887 = vmatprep.mubr.bf16.mxu0 0
      %888 = vmatmul.mubr.bf16.gmra.mrb[0].mxu0 %v828
      %v889 = vpop.f32.mrb[0].mxu0
      %v890 = vadd.f32 0.0, %v889
      %v891 = vpop.f32.mrb[0].mxu0
      %v892 = vpop.f32.mrb[0].mxu0
      %v893 = vadd.f32 0.0, %v892
      %v894 = vpop.f32.mrb[0].mxu0
      %895 = vmatprep.mubr.bf16.mxu0 0
      %896 = vmatmul.mubr.bf16.gmra.mrb[0].mxu0 %v831
      %v897 = vpop.f32.mrb[0].mxu0
      %v898 = vadd.f32 0.0, %v897
      %v899 = vpop.f32.mrb[0].mxu0
      %v900 = vpop.f32.mrb[0].mxu0
      %v901 = vadd.f32 0.0, %v900
      %v902 = vpop.f32.mrb[0].mxu0
      %903 = vmatprep.mubr.bf16.mxu0 0
      %904 = vmatmul.mubr.bf16.gmra.mrb[0].mxu0 %v834
      %v905 = vpop.f32.mrb[0].mxu0
      %v906 = vadd.f32 0.0, %v905
      %v907 = vpop.f32.mrb[0].mxu0
      %v908 = vpop.f32.mrb[0].mxu0
      %v909 = vadd.f32 0.0, %v908
      %v910 = vpop.f32.mrb[0].mxu0
      %911 = vdwg.mxu0
      %v912 = vadd.f32 %v746, %v874
      %v913 = vadd.f32 %v749, %v877
      %v914 = vadd.f32 %v754, %v882
      %v915 = vadd.f32 %v757, %v885
      %v916 = vadd.f32 %v762, %v890
      %v917 = vadd.f32 %v765, %v893
      %v918 = vadd.f32 %v770, %v898
      %v919 = vadd.f32 %v773, %v901
      %v920 = vadd.f32 %v778, %v906
      %v921 = vadd.f32 %v781, %v909
      %v922 = vld [vmem:[#allocation2] sm:$0x80]
      %v923 = vld [vmem:[#allocation2 + $0x28] sm:$0xff]
      %s924 = scalar_lea.vmem %s4, 6
      %v925 = vld [vmem:[%s924] sm:$0x3]
      %vm926 = vsmask.f32 256
      %v928 = vshrl.u32 %v922, 16
      %v930 = vrot.slane %v928, 7
      %v931 = vrot.slane %v649, 7
      %v932 = vor.u32 %v931, %v652
      %v933 = vsel %vm926, %v930, %v932
      %v934 = vrot.slane %v658, 7
      %v935 = vor.u32 %v934, %v661
      %v936 = vsel %vm926, %v931, %v935
      %v937 = vrot.slane %v667, 7
      %v938 = vor.u32 %v937, %v670
      %v939 = vsel %vm926, %v934, %v938
      %v940 = vrot.slane %v676, 7
      %v941 = vor.u32 %v940, %v679
      %v942 = vsel %vm926, %v937, %v941
      %v944 = vshrl.u32 %v923, 16
      %v946 = vrot.slane %v944, 7
      %v947 = vshll.u32 %v923, 16
      %v949 = vor.u32 %v946, %v947
      %v950 = vsel %vm926, %v940, %v949
      %v952 = vsel %vm307, %v933, 0
      %v955 = vsel %vm307, %v936, 0
      %v958 = vsel %vm307, %v939, 0
      %v961 = vsel %vm307, %v942, 0
      %v964 = vsel %vm307, %v950, 0
      %v967 = vsel %vm562, %v925, 0
      %969 = vmatprep.subr.bf16.mxu0 0
      %970 = vmatpush1.bf16.msra.mxu0 %v967
      %971 = vmatprep.subr.bf16.mxu0 0
      %972 = vmatpush1.bf16.msra.mxu0 0
      %973 = vmatprep.subr.bf16.mxu0 0
      %974 = vmatpush1.bf16.msra.mxu0 0
      %975 = vmatprep.subr.bf16.mxu0 0
      %976 = vmatpush1.bf16.msra.mxu0 0
      %977 = vmatprep.subr.bf16.mxu0 0
      %978 = vmatpush1.bf16.msra.mxu0 0
      %979 = vmatprep.subr.bf16.mxu0 0
      %980 = vmatpush1.bf16.msra.mxu0 0
      %981 = vmatprep.subr.bf16.mxu0 0
      %982 = vmatpush1.bf16.msra.mxu0 0
      %983 = vmatprep.subr.bf16.mxu0 0
      %984 = vmatpush1.bf16.msra.mxu0 0
      %985 = vmatprep.subr.bf16.mxu0 0
      %986 = vmatpush1.bf16.msra.mxu0 0
      %987 = vmatprep.subr.bf16.mxu0 0
      %988 = vmatpush1.bf16.msra.mxu0 0
      %989 = vmatprep.subr.bf16.mxu0 0
      %990 = vmatpush1.bf16.msra.mxu0 0
      %991 = vmatprep.subr.bf16.mxu0 0
      %992 = vmatpush1.bf16.msra.mxu0 0
      %993 = vmatprep.subr.bf16.mxu0 0
      %994 = vmatpush1.bf16.msra.mxu0 0
      %995 = vmatprep.subr.bf16.mxu0 0
      %996 = vmatpush1.bf16.msra.mxu0 0
      %997 = vmatprep.subr.bf16.mxu0 0
      %998 = vmatpush1.bf16.msra.mxu0 0
      %999 = vmatprep.subr.bf16.mxu0 0
      %1000 = vmatpush1.bf16.msra.mxu0 0
      %1001 = vmatprep.mubr.bf16.mxu0 0
      %1002 = vmatmul.mubr.bf16.gmra.mrb[0].mxu0 %v952
      %v1003 = vpop.f32.mrb[0].mxu0
      %v1004 = vadd.f32 0.0, %v1003
      %v1005 = vpop.f32.mrb[0].mxu0
      %v1006 = vpop.f32.mrb[0].mxu0
      %v1007 = vadd.f32 0.0, %v1006
      %v1008 = vpop.f32.mrb[0].mxu0
      %1009 = vmatprep.mubr.bf16.mxu0 0
      %1010 = vmatmul.mubr.bf16.gmra.mrb[0].mxu0 %v955
      %v1011 = vpop.f32.mrb[0].mxu0
      %v1012 = vadd.f32 0.0, %v1011
      %v1013 = vpop.f32.mrb[0].mxu0
      %v1014 = vpop.f32.mrb[0].mxu0
      %v1015 = vadd.f32 0.0, %v1014
      %v1016 = vpop.f32.mrb[0].mxu0
      %1017 = vmatprep.mubr.bf16.mxu0 0
      %1018 = vmatmul.mubr.bf16.gmra.mrb[0].mxu0 %v958
      %v1019 = vpop.f32.mrb[0].mxu0
      %v1020 = vadd.f32 0.0, %v1019
      %v1021 = vpop.f32.mrb[0].mxu0
      %v1022 = vpop.f32.mrb[0].mxu0
      %v1023 = vadd.f32 0.0, %v1022
      %v1024 = vpop.f32.mrb[0].mxu0
      %1025 = vmatprep.mubr.bf16.mxu0 0
      %1026 = vmatmul.mubr.bf16.gmra.mrb[0].mxu0 %v961
      %v1027 = vpop.f32.mrb[0].mxu0
      %v1028 = vadd.f32 0.0, %v1027
      %v1029 = vpop.f32.mrb[0].mxu0
      %v1030 = vpop.f32.mrb[0].mxu0
      %v1031 = vadd.f32 0.0, %v1030
      %v1032 = vpop.f32.mrb[0].mxu0
      %1033 = vmatprep.mubr.bf16.mxu0 0
      %1034 = vmatmul.mubr.bf16.gmra.mrb[0].mxu0 %v964
      %v1035 = vpop.f32.mrb[0].mxu0
      %v1036 = vadd.f32 0.0, %v1035
      %v1037 = vpop.f32.mrb[0].mxu0
      %v1038 = vpop.f32.mrb[0].mxu0
      %v1039 = vadd.f32 0.0, %v1038
      %v1040 = vpop.f32.mrb[0].mxu0
      %1041 = vdwg.mxu0
      %v1042 = vadd.f32 %v912, %v1004
      %v1043 = vadd.f32 %v913, %v1007
      %v1044 = vadd.f32 %v914, %v1012
      %v1045 = vadd.f32 %v915, %v1015
      %v1046 = vadd.f32 %v916, %v1020
      %v1047 = vadd.f32 %v917, %v1023
      %v1048 = vadd.f32 %v918, %v1028
      %v1049 = vadd.f32 %v919, %v1031
      %v1050 = vadd.f32 %v920, %v1036
      %v1051 = vadd.f32 %v921, %v1039
      %s1052 = scalar_lea.vmem %s4, 8
      %v1053 = vld [vmem:[%s1052] sm:$0x3]
      %v1054 = vsel %vm307, %v520, 0
      %v1056 = vsel %vm307, %v521, 0
      %v1058 = vsel %vm307, %v522, 0
      %v1060 = vsel %vm307, %v523, 0
      %v1062 = vsel %vm307, %v923, 0
      %v1065 = vsel %vm562, %v1053, 0
      %1067 = vmatprep.subr.bf16.mxu0 0
      %1068 = vmatpush1.bf16.msra.mxu0 %v1065
      %1069 = vmatprep.subr.bf16.mxu0 0
      %1070 = vmatpush1.bf16.msra.mxu0 0
      %1071 = vmatprep.subr.bf16.mxu0 0
      %1072 = vmatpush1.bf16.msra.mxu0 0
      %1073 = vmatprep.subr.bf16.mxu0 0
      %1074 = vmatpush1.bf16.msra.mxu0 0
      %1075 = vmatprep.subr.bf16.mxu0 0
      %1076 = vmatpush1.bf16.msra.mxu0 0
      %1077 = vmatprep.subr.bf16.mxu0 0
      %1078 = vmatpush1.bf16.msra.mxu0 0
      %1079 = vmatprep.subr.bf16.mxu0 0
      %1080 = vmatpush1.bf16.msra.mxu0 0
      %1081 = vmatprep.subr.bf16.mxu0 0
      %1082 = vmatpush1.bf16.msra.mxu0 0
      %1083 = vmatprep.subr.bf16.mxu0 0
      %1084 = vmatpush1.bf16.msra.mxu0 0
      %1085 = vmatprep.subr.bf16.mxu0 0
      %1086 = vmatpush1.bf16.msra.mxu0 0
      %1087 = vmatprep.subr.bf16.mxu0 0
      %1088 = vmatpush1.bf16.msra.mxu0 0
      %1089 = vmatprep.subr.bf16.mxu0 0
      %1090 = vmatpush1.bf16.msra.mxu0 0
      %1091 = vmatprep.subr.bf16.mxu0 0
      %1092 = vmatpush1.bf16.msra.mxu0 0
      %1093 = vmatprep.subr.bf16.mxu0 0
      %1094 = vmatpush1.bf16.msra.mxu0 0
      %1095 = vmatprep.subr.bf16.mxu0 0
      %1096 = vmatpush1.bf16.msra.mxu0 0
      %1097 = vmatprep.subr.bf16.mxu0 0
      %1098 = vmatpush1.bf16.msra.mxu0 0
      %1099 = vmatprep.mubr.bf16.mxu0 0
      %1100 = vmatmul.mubr.bf16.gmra.mrb[0].mxu0 %v1054
      %v1101 = vpop.f32.mrb[0].mxu0
      %v1102 = vadd.f32 0.0, %v1101
      %v1103 = vpop.f32.mrb[0].mxu0
      %v1104 = vpop.f32.mrb[0].mxu0
      %v1105 = vadd.f32 0.0, %v1104
      %v1106 = vpop.f32.mrb[0].mxu0
      %1107 = vmatprep.mubr.bf16.mxu0 0
      %1108 = vmatmul.mubr.bf16.gmra.mrb[0].mxu0 %v1056
      %v1109 = vpop.f32.mrb[0].mxu0
      %v1110 = vadd.f32 0.0, %v1109
      %v1111 = vpop.f32.mrb[0].mxu0
      %v1112 = vpop.f32.mrb[0].mxu0
      %v1113 = vadd.f32 0.0, %v1112
      %v1114 = vpop.f32.mrb[0].mxu0
      %1115 = vmatprep.mubr.bf16.mxu0 0
      %1116 = vmatmul.mubr.bf16.gmra.mrb[0].mxu0 %v1058
      %v1117 = vpop.f32.mrb[0].mxu0
      %v1118 = vadd.f32 0.0, %v1117
      %v1119 = vpop.f32.mrb[0].mxu0
      %v1120 = vpop.f32.mrb[0].mxu0
      %v1121 = vadd.f32 0.0, %v1120
      %v1122 = vpop.f32.mrb[0].mxu0
      %1123 = vmatprep.mubr.bf16.mxu0 0
      %1124 = vmatmul.mubr.bf16.gmra.mrb[0].mxu0 %v1060
      %v1125 = vpop.f32.mrb[0].mxu0
      %v1126 = vadd.f32 0.0, %v1125
      %v1127 = vpop.f32.mrb[0].mxu0
      %v1128 = vpop.f32.mrb[0].mxu0
      %v1129 = vadd.f32 0.0, %v1128
      %v1130 = vpop.f32.mrb[0].mxu0
      %1131 = vmatprep.mubr.bf16.mxu0 0
      %1132 = vmatmul.mubr.bf16.gmra.mrb[0].mxu0 %v1062
      %v1133 = vpop.f32.mrb[0].mxu0
      %v1134 = vadd.f32 0.0, %v1133
      %v1135 = vpop.f32.mrb[0].mxu0
      %v1136 = vpop.f32.mrb[0].mxu0
      %v1137 = vadd.f32 0.0, %v1136
      %v1138 = vpop.f32.mrb[0].mxu0
      %1139 = vdwg.mxu0
      %v1140 = vadd.f32 %v1042, %v1102
      %v1141 = vadd.f32 %v1043, %v1105
      %v1142 = vadd.f32 %v1044, %v1110
      %v1143 = vadd.f32 %v1045, %v1113
      %v1144 = vadd.f32 %v1046, %v1118
      %v1145 = vadd.f32 %v1047, %v1121
      %v1146 = vadd.f32 %v1048, %v1126
      %v1147 = vadd.f32 %v1049, %v1129
      %v1148 = vadd.f32 %v1050, %v1134
      %v1149 = vadd.f32 %v1051, %v1137
      %v1150 = vld [vmem:[#allocation2 + $0x8] sm:$0xff]
      %v1151 = vld [vmem:[#allocation2 + $0x10] sm:$0xff]
      %v1152 = vld [vmem:[#allocation2 + $0x18] sm:$0xff]
      %v1153 = vld [vmem:[#allocation2 + $0x20] sm:$0xff]
      %v1154 = vld [vmem:[#allocation2 + $0x28] sm:$0xff]
      %v1155 = vld [vmem:[#allocation2 + $0x30] sm:$0x1]
      %s1156 = scalar_lea.vmem %s4, 10
      %v1157 = vld [vmem:[%s1156] sm:$0x3]
      %vm1158 = vsmask.f32 7424
      %v1160 = vshrl.u32 %v1150, 16
      %v1162 = vshll.u32 %v1150, 16
      %v1164 = vrot.slane %v1162, 1
      %v1165 = vor.u32 %v1160, %v1164
      %v1167 = vshll.u32 %v1151, 16
      %v1169 = vrot.slane %v1167, 1
      %v1170 = vsel %vm1158, %v1165, %v1169
      %v1171 = vshrl.u32 %v1151, 16
      %v1173 = vor.u32 %v1171, %v1169
      %v1175 = vshll.u32 %v1152, 16
      %v1177 = vrot.slane %v1175, 1
      %v1178 = vsel %vm1158, %v1173, %v1177
      %v1179 = vshrl.u32 %v1152, 16
      %v1181 = vor.u32 %v1179, %v1177
      %v1183 = vshll.u32 %v1153, 16
      %v1185 = vrot.slane %v1183, 1
      %v1186 = vsel %vm1158, %v1181, %v1185
      %v1187 = vshrl.u32 %v1153, 16
      %v1189 = vor.u32 %v1187, %v1185
      %v1191 = vshll.u32 %v1154, 16
      %v1193 = vrot.slane %v1191, 1
      %v1194 = vsel %vm1158, %v1189, %v1193
      %v1195 = vshrl.u32 %v1154, 16
      %v1197 = vor.u32 %v1195, %v1193
      %v1199 = vshll.u32 %v1155, 16
      %v1201 = vrot.slane %v1199, 1
      %v1202 = vsel %vm1158, %v1197, %v1201
      %v1204 = vsel %vm307, %v1170, 0
      %v1207 = vsel %vm307, %v1178, 0
      %v1210 = vsel %vm307, %v1186, 0
      %v1213 = vsel %vm307, %v1194, 0
      %v1216 = vsel %vm307, %v1202, 0
      %v1219 = vsel %vm562, %v1157, 0
      %1221 = vmatprep.subr.bf16.mxu0 0
      %1222 = vmatpush1.bf16.msra.mxu0 %v1219
      %1223 = vmatprep.subr.bf16.mxu0 0
      %1224 = vmatpush1.bf16.msra.mxu0 0
      %1225 = vmatprep.subr.bf16.mxu0 0
      %1226 = vmatpush1.bf16.msra.mxu0 0
      %1227 = vmatprep.subr.bf16.mxu0 0
      %1228 = vmatpush1.bf16.msra.mxu0 0
      %1229 = vmatprep.subr.bf16.mxu0 0
      %1230 = vmatpush1.bf16.msra.mxu0 0
      %1231 = vmatprep.subr.bf16.mxu0 0
      %1232 = vmatpush1.bf16.msra.mxu0 0
      %1233 = vmatprep.subr.bf16.mxu0 0
      %1234 = vmatpush1.bf16.msra.mxu0 0
      %1235 = vmatprep.subr.bf16.mxu0 0
      %1236 = vmatpush1.bf16.msra.mxu0 0
      %1237 = vmatprep.subr.bf16.mxu0 0
      %1238 = vmatpush1.bf16.msra.mxu0 0
      %1239 = vmatprep.subr.bf16.mxu0 0
      %1240 = vmatpush1.bf16.msra.mxu0 0
      %1241 = vmatprep.subr.bf16.mxu0 0
      %1242 = vmatpush1.bf16.msra.mxu0 0
      %1243 = vmatprep.subr.bf16.mxu0 0
      %1244 = vmatpush1.bf16.msra.mxu0 0
      %1245 = vmatprep.subr.bf16.mxu0 0
      %1246 = vmatpush1.bf16.msra.mxu0 0
      %1247 = vmatprep.subr.bf16.mxu0 0
      %1248 = vmatpush1.bf16.msra.mxu0 0
      %1249 = vmatprep.subr.bf16.mxu0 0
      %1250 = vmatpush1.bf16.msra.mxu0 0
      %1251 = vmatprep.subr.bf16.mxu0 0
      %1252 = vmatpush1.bf16.msra.mxu0 0
      %1253 = vmatprep.mubr.bf16.mxu0 0
      %1254 = vmatmul.mubr.bf16.gmra.mrb[0].mxu0 %v1204
      %v1255 = vpop.f32.mrb[0].mxu0
      %v1256 = vadd.f32 0.0, %v1255
      %v1257 = vpop.f32.mrb[0].mxu0
      %v1258 = vpop.f32.mrb[0].mxu0
      %v1259 = vadd.f32 0.0, %v1258
      %v1260 = vpop.f32.mrb[0].mxu0
      %1261 = vmatprep.mubr.bf16.mxu0 0
      %1262 = vmatmul.mubr.bf16.gmra.mrb[0].mxu0 %v1207
      %v1263 = vpop.f32.mrb[0].mxu0
      %v1264 = vadd.f32 0.0, %v1263
      %v1265 = vpop.f32.mrb[0].mxu0
      %v1266 = vpop.f32.mrb[0].mxu0
      %v1267 = vadd.f32 0.0, %v1266
      %v1268 = vpop.f32.mrb[0].mxu0
      %1269 = vmatprep.mubr.bf16.mxu0 0
      %1270 = vmatmul.mubr.bf16.gmra.mrb[0].mxu0 %v1210
      %v1271 = vpop.f32.mrb[0].mxu0
      %v1272 = vadd.f32 0.0, %v1271
      %v1273 = vpop.f32.mrb[0].mxu0
      %v1274 = vpop.f32.mrb[0].mxu0
      %v1275 = vadd.f32 0.0, %v1274
      %v1276 = vpop.f32.mrb[0].mxu0
      %1277 = vmatprep.mubr.bf16.mxu0 0
      %1278 = vmatmul.mubr.bf16.gmra.mrb[0].mxu0 %v1213
      %v1279 = vpop.f32.mrb[0].mxu0
      %v1280 = vadd.f32 0.0, %v1279
      %v1281 = vpop.f32.mrb[0].mxu0
      %v1282 = vpop.f32.mrb[0].mxu0
      %v1283 = vadd.f32 0.0, %v1282
      %v1284 = vpop.f32.mrb[0].mxu0
      %1285 = vmatprep.mubr.bf16.mxu0 0
      %1286 = vmatmul.mubr.bf16.gmra.mrb[0].mxu0 %v1216
      %v1287 = vpop.f32.mrb[0].mxu0
      %v1288 = vadd.f32 0.0, %v1287
      %v1289 = vpop.f32.mrb[0].mxu0
      %v1290 = vpop.f32.mrb[0].mxu0
      %v1291 = vadd.f32 0.0, %v1290
      %v1292 = vpop.f32.mrb[0].mxu0
      %1293 = vdwg.mxu0
      %v1294 = vadd.f32 %v1140, %v1256
      %v1295 = vadd.f32 %v1141, %v1259
      %v1296 = vadd.f32 %v1142, %v1264
      %v1297 = vadd.f32 %v1143, %v1267
      %v1298 = vadd.f32 %v1144, %v1272
      %v1299 = vadd.f32 %v1145, %v1275
      %v1300 = vadd.f32 %v1146, %v1280
      %v1301 = vadd.f32 %v1147, %v1283
      %v1302 = vadd.f32 %v1148, %v1288
      %v1303 = vadd.f32 %v1149, %v1291
      %v1304 = vld [vmem:[#allocation2 + $0x8] sm:$0xf0]
      %v1305 = vld [vmem:[#allocation2 + $0x30] sm:$0x1f]
      %s1306 = scalar_lea.vmem %s4, 12
      %v1307 = vld [vmem:[%s1306] sm:$0x3]
      %vm1308 = vsmask.f32 3328
      %v1310 = vshrl.u32 %v1304, 16
      %v1312 = vrot.slane %v1310, 4
      %v1313 = vshll.u32 %v1304, 16
      %v1315 = vrot.slane %v1313, 5
      %v1316 = vor.u32 %v1312, %v1315
      %v1317 = vrot.slane %v1171, 4
      %v1318 = vrot.slane %v1167, 5
      %v1319 = vor.u32 %v1317, %v1318
      %v1320 = vsel %vm1308, %v1316, %v1319
      %v1321 = vrot.slane %v1179, 4
      %v1322 = vrot.slane %v1175, 5
      %v1323 = vor.u32 %v1321, %v1322
      %v1324 = vsel %vm1308, %v1319, %v1323
      %v1325 = vrot.slane %v1187, 4
      %v1326 = vrot.slane %v1183, 5
      %v1327 = vor.u32 %v1325, %v1326
      %v1328 = vsel %vm1308, %v1323, %v1327
      %v1329 = vrot.slane %v1195, 4
      %v1330 = vrot.slane %v1191, 5
      %v1331 = vor.u32 %v1329, %v1330
      %v1332 = vsel %vm1308, %v1327, %v1331
      %v1334 = vshrl.u32 %v1305, 16
      %v1336 = vrot.slane %v1334, 4
      %v1337 = vshll.u32 %v1305, 16
      %v1339 = vrot.slane %v1337, 5
      %v1340 = vor.u32 %v1336, %v1339
      %v1341 = vsel %vm1308, %v1331, %v1340
      %v1343 = vsel %vm307, %v1320, 0
      %v1346 = vsel %vm307, %v1324, 0
      %v1349 = vsel %vm307, %v1328, 0
      %v1352 = vsel %vm307, %v1332, 0
      %v1355 = vsel %vm307, %v1341, 0
      %v1358 = vsel %vm562, %v1307, 0
      %1360 = vmatprep.subr.bf16.mxu0 0
      %1361 = vmatpush1.bf16.msra.mxu0 %v1358
      %1362 = vmatprep.subr.bf16.mxu0 0
      %1363 = vmatpush1.bf16.msra.mxu0 0
      %1364 = vmatprep.subr.bf16.mxu0 0
      %1365 = vmatpush1.bf16.msra.mxu0 0
      %1366 = vmatprep.subr.bf16.mxu0 0
      %1367 = vmatpush1.bf16.msra.mxu0 0
      %1368 = vmatprep.subr.bf16.mxu0 0
      %1369 = vmatpush1.bf16.msra.mxu0 0
      %1370 = vmatprep.subr.bf16.mxu0 0
      %1371 = vmatpush1.bf16.msra.mxu0 0
      %1372 = vmatprep.subr.bf16.mxu0 0
      %1373 = vmatpush1.bf16.msra.mxu0 0
      %1374 = vmatprep.subr.bf16.mxu0 0
      %1375 = vmatpush1.bf16.msra.mxu0 0
      %1376 = vmatprep.subr.bf16.mxu0 0
      %1377 = vmatpush1.bf16.msra.mxu0 0
      %1378 = vmatprep.subr.bf16.mxu0 0
      %1379 = vmatpush1.bf16.msra.mxu0 0
      %1380 = vmatprep.subr.bf16.mxu0 0
      %1381 = vmatpush1.bf16.msra.mxu0 0
      %1382 = vmatprep.subr.bf16.mxu0 0
      %1383 = vmatpush1.bf16.msra.mxu0 0
      %1384 = vmatprep.subr.bf16.mxu0 0
      %1385 = vmatpush1.bf16.msra.mxu0 0
      %1386 = vmatprep.subr.bf16.mxu0 0
      %1387 = vmatpush1.bf16.msra.mxu0 0
      %1388 = vmatprep.subr.bf16.mxu0 0
      %1389 = vmatpush1.bf16.msra.mxu0 0
      %1390 = vmatprep.subr.bf16.mxu0 0
      %1391 = vmatpush1.bf16.msra.mxu0 0
      %1392 = vmatprep.mubr.bf16.mxu0 0
      %1393 = vmatmul.mubr.bf16.gmra.mrb[0].mxu0 %v1343
      %v1394 = vpop.f32.mrb[0].mxu0
      %v1395 = vadd.f32 0.0, %v1394
      %v1396 = vpop.f32.mrb[0].mxu0
      %v1397 = vpop.f32.mrb[0].mxu0
      %v1398 = vadd.f32 0.0, %v1397
      %v1399 = vpop.f32.mrb[0].mxu0
      %1400 = vmatprep.mubr.bf16.mxu0 0
      %1401 = vmatmul.mubr.bf16.gmra.mrb[0].mxu0 %v1346
      %v1402 = vpop.f32.mrb[0].mxu0
      %v1403 = vadd.f32 0.0, %v1402
      %v1404 = vpop.f32.mrb[0].mxu0
      %v1405 = vpop.f32.mrb[0].mxu0
      %v1406 = vadd.f32 0.0, %v1405
      %v1407 = vpop.f32.mrb[0].mxu0
      %1408 = vmatprep.mubr.bf16.mxu0 0
      %1409 = vmatmul.mubr.bf16.gmra.mrb[0].mxu0 %v1349
      %v1410 = vpop.f32.mrb[0].mxu0
      %v1411 = vadd.f32 0.0, %v1410
      %v1412 = vpop.f32.mrb[0].mxu0
      %v1413 = vpop.f32.mrb[0].mxu0
      %v1414 = vadd.f32 0.0, %v1413
      %v1415 = vpop.f32.mrb[0].mxu0
      %1416 = vmatprep.mubr.bf16.mxu0 0
      %1417 = vmatmul.mubr.bf16.gmra.mrb[0].mxu0 %v1352
      %v1418 = vpop.f32.mrb[0].mxu0
      %v1419 = vadd.f32 0.0, %v1418
      %v1420 = vpop.f32.mrb[0].mxu0
      %v1421 = vpop.f32.mrb[0].mxu0
      %v1422 = vadd.f32 0.0, %v1421
      %v1423 = vpop.f32.mrb[0].mxu0
      %1424 = vmatprep.mubr.bf16.mxu0 0
      %1425 = vmatmul.mubr.bf16.gmra.mrb[0].mxu0 %v1355
      %v1426 = vpop.f32.mrb[0].mxu0
      %v1427 = vadd.f32 0.0, %v1426
      %v1428 = vpop.f32.mrb[0].mxu0
      %v1429 = vpop.f32.mrb[0].mxu0
      %v1430 = vadd.f32 0.0, %v1429
      %v1431 = vpop.f32.mrb[0].mxu0
      %1432 = vdwg.mxu0
      %v1433 = vadd.f32 %v1294, %v1395
      %v1434 = vadd.f32 %v1295, %v1398
      %v1435 = vadd.f32 %v1296, %v1403
      %v1436 = vadd.f32 %v1297, %v1406
      %v1437 = vadd.f32 %v1298, %v1411
      %v1438 = vadd.f32 %v1299, %v1414
      %v1439 = vadd.f32 %v1300, %v1419
      %v1440 = vadd.f32 %v1301, %v1422
      %v1441 = vadd.f32 %v1302, %v1427
      %v1442 = vadd.f32 %v1303, %v1430
      %v1443 = vld [vmem:[#allocation2 + $0x8] sm:$0xe0]
      %s1444 = scalar_lea.vmem %s4, 14
      %v1445 = vld [vmem:[%s1444] sm:$0x3]
      %vm1452 = vcmask 1042432
      %v1453 = vrot.slane %v1443, 5
      %v1454 = vrot.slane %v1151, 5
      %v1455 = vsel %vm1452, %v1453, %v1454
      %v1456 = vrot.slane %v1152, 5
      %v1457 = vsel %vm1452, %v1454, %v1456
      %v1458 = vrot.slane %v1153, 5
      %v1459 = vsel %vm1452, %v1456, %v1458
      %v1460 = vrot.slane %v1154, 5
      %v1461 = vsel %vm1452, %v1458, %v1460
      %v1462 = vrot.slane %v1305, 5
      %v1463 = vsel %vm1452, %v1460, %v1462
      %v1465 = vsel %vm307, %v1455, 0
      %v1468 = vsel %vm307, %v1457, 0
      %v1471 = vsel %vm307, %v1459, 0
      %v1474 = vsel %vm307, %v1461, 0
      %v1477 = vsel %vm307, %v1463, 0
      %v1480 = vsel %vm562, %v1445, 0
      %1482 = vmatprep.subr.bf16.mxu0 0
      %1483 = vmatpush1.bf16.msra.mxu0 %v1480
      %1484 = vmatprep.subr.bf16.mxu0 0
      %1485 = vmatpush1.bf16.msra.mxu0 0
      %1486 = vmatprep.subr.bf16.mxu0 0
      %1487 = vmatpush1.bf16.msra.mxu0 0
      %1488 = vmatprep.subr.bf16.mxu0 0
      %1489 = vmatpush1.bf16.msra.mxu0 0
      %1490 = vmatprep.subr.bf16.mxu0 0
      %1491 = vmatpush1.bf16.msra.mxu0 0
      %1492 = vmatprep.subr.bf16.mxu0 0
      %1493 = vmatpush1.bf16.msra.mxu0 0
      %1494 = vmatprep.subr.bf16.mxu0 0
      %1495 = vmatpush1.bf16.msra.mxu0 0
      %1496 = vmatprep.subr.bf16.mxu0 0
      %1497 = vmatpush1.bf16.msra.mxu0 0
      %1498 = vmatprep.subr.bf16.mxu0 0
      %1499 = vmatpush1.bf16.msra.mxu0 0
      %1500 = vmatprep.subr.bf16.mxu0 0
      %1501 = vmatpush1.bf16.msra.mxu0 0
      %1502 = vmatprep.subr.bf16.mxu0 0
      %1503 = vmatpush1.bf16.msra.mxu0 0
      %1504 = vmatprep.subr.bf16.mxu0 0
      %1505 = vmatpush1.bf16.msra.mxu0 0
      %1506 = vmatprep.subr.bf16.mxu0 0
      %1507 = vmatpush1.bf16.msra.mxu0 0
      %1508 = vmatprep.subr.bf16.mxu0 0
      %1509 = vmatpush1.bf16.msra.mxu0 0
      %1510 = vmatprep.subr.bf16.mxu0 0
      %1511 = vmatpush1.bf16.msra.mxu0 0
      %1512 = vmatprep.subr.bf16.mxu0 0
      %1513 = vmatpush1.bf16.msra.mxu0 0
      %1514 = vmatprep.mubr.bf16.mxu0 0
      %1515 = vmatmul.mubr.bf16.gmra.mrb[0].mxu0 %v1465
      %v1516 = vpop.f32.mrb[0].mxu0
      %v1517 = vadd.f32 0.0, %v1516
      %v1518 = vpop.f32.mrb[0].mxu0
      %v1519 = vpop.f32.mrb[0].mxu0
      %v1520 = vadd.f32 0.0, %v1519
      %v1521 = vpop.f32.mrb[0].mxu0
      %1522 = vmatprep.mubr.bf16.mxu0 0
      %1523 = vmatmul.mubr.bf16.gmra.mrb[0].mxu0 %v1468
      %v1524 = vpop.f32.mrb[0].mxu0
      %v1525 = vadd.f32 0.0, %v1524
      %v1526 = vpop.f32.mrb[0].mxu0
      %v1527 = vpop.f32.mrb[0].mxu0
      %v1528 = vadd.f32 0.0, %v1527
      %v1529 = vpop.f32.mrb[0].mxu0
      %1530 = vmatprep.mubr.bf16.mxu0 0
      %1531 = vmatmul.mubr.bf16.gmra.mrb[0].mxu0 %v1471
      %v1532 = vpop.f32.mrb[0].mxu0
      %v1533 = vadd.f32 0.0, %v1532
      %v1534 = vpop.f32.mrb[0].mxu0
      %v1535 = vpop.f32.mrb[0].mxu0
      %v1536 = vadd.f32 0.0, %v1535
      %v1537 = vpop.f32.mrb[0].mxu0
      %1538 = vmatprep.mubr.bf16.mxu0 0
      %1539 = vmatmul.mubr.bf16.gmra.mrb[0].mxu0 %v1474
      %v1540 = vpop.f32.mrb[0].mxu0
      %v1541 = vadd.f32 0.0, %v1540
      %v1542 = vpop.f32.mrb[0].mxu0
      %v1543 = vpop.f32.mrb[0].mxu0
      %v1544 = vadd.f32 0.0, %v1543
      %v1545 = vpop.f32.mrb[0].mxu0
      %1546 = vmatprep.mubr.bf16.mxu0 0
      %1547 = vmatmul.mubr.bf16.gmra.mrb[0].mxu0 %v1477
      %v1548 = vpop.f32.mrb[0].mxu0
      %v1549 = vadd.f32 0.0, %v1548
      %v1550 = vpop.f32.mrb[0].mxu0
      %v1551 = vpop.f32.mrb[0].mxu0
      %v1552 = vadd.f32 0.0, %v1551
      %v1553 = vpop.f32.mrb[0].mxu0
      %1554 = vdwg.mxu0
      %v1555 = vadd.f32 %v1433, %v1517
      %v1556 = vadd.f32 %v1434, %v1520
      %v1557 = vadd.f32 %v1435, %v1525
      %v1558 = vadd.f32 %v1436, %v1528
      %v1559 = vadd.f32 %v1437, %v1533
      %v1560 = vadd.f32 %v1438, %v1536
      %v1561 = vadd.f32 %v1439, %v1541
      %v1562 = vadd.f32 %v1440, %v1544
      %v1563 = vadd.f32 %v1441, %v1549
      %v1564 = vadd.f32 %v1442, %v1552
      %v1565 = vld [vmem:[#allocation2 + $0x30] sm:$0x3f]
      %s1566 = scalar_lea.vmem %s4, 16
      %v1567 = vld [vmem:[%s1566] sm:$0x3]
      %vm1568 = vsmask.f32 2304
      %v1570 = vshrl.u32 %v1443, 16
      %v1572 = vrot.slane %v1570, 5
      %v1573 = vshll.u32 %v1443, 16
      %v1575 = vrot.slane %v1573, 6
      %v1576 = vor.u32 %v1572, %v1575
      %v1577 = vrot.slane %v1171, 5
      %v1578 = vrot.slane %v1167, 6
      %v1579 = vor.u32 %v1577, %v1578
      %v1580 = vsel %vm1568, %v1576, %v1579
      %v1581 = vrot.slane %v1179, 5
      %v1582 = vrot.slane %v1175, 6
      %v1583 = vor.u32 %v1581, %v1582
      %v1584 = vsel %vm1568, %v1579, %v1583
      %v1585 = vrot.slane %v1187, 5
      %v1586 = vrot.slane %v1183, 6
      %v1587 = vor.u32 %v1585, %v1586
      %v1588 = vsel %vm1568, %v1583, %v1587
      %v1589 = vrot.slane %v1195, 5
      %v1590 = vrot.slane %v1191, 6
      %v1591 = vor.u32 %v1589, %v1590
      %v1592 = vsel %vm1568, %v1587, %v1591
      %v1594 = vshrl.u32 %v1565, 16
      %v1596 = vrot.slane %v1594, 5
      %v1597 = vshll.u32 %v1565, 16
      %v1599 = vrot.slane %v1597, 6
      %v1600 = vor.u32 %v1596, %v1599
      %v1601 = vsel %vm1568, %v1591, %v1600
      %v1603 = vsel %vm307, %v1580, 0
      %v1606 = vsel %vm307, %v1584, 0
      %v1609 = vsel %vm307, %v1588, 0
      %v1612 = vsel %vm307, %v1592, 0
      %v1615 = vsel %vm307, %v1601, 0
      %v1618 = vsel %vm562, %v1567, 0
      %1620 = vmatprep.subr.bf16.mxu0 0
      %1621 = vmatpush1.bf16.msra.mxu0 %v1618
      %1622 = vmatprep.subr.bf16.mxu0 0
      %1623 = vmatpush1.bf16.msra.mxu0 0
      %1624 = vmatprep.subr.bf16.mxu0 0
      %1625 = vmatpush1.bf16.msra.mxu0 0
      %1626 = vmatprep.subr.bf16.mxu0 0
      %1627 = vmatpush1.bf16.msra.mxu0 0
      %1628 = vmatprep.subr.bf16.mxu0 0
      %1629 = vmatpush1.bf16.msra.mxu0 0
      %1630 = vmatprep.subr.bf16.mxu0 0
      %1631 = vmatpush1.bf16.msra.mxu0 0
      %1632 = vmatprep.subr.bf16.mxu0 0
      %1633 = vmatpush1.bf16.msra.mxu0 0
      %1634 = vmatprep.subr.bf16.mxu0 0
      %1635 = vmatpush1.bf16.msra.mxu0 0
      %1636 = vmatprep.subr.bf16.mxu0 0
      %1637 = vmatpush1.bf16.msra.mxu0 0
      %1638 = vmatprep.subr.bf16.mxu0 0
      %1639 = vmatpush1.bf16.msra.mxu0 0
      %1640 = vmatprep.subr.bf16.mxu0 0
      %1641 = vmatpush1.bf16.msra.mxu0 0
      %1642 = vmatprep.subr.bf16.mxu0 0
      %1643 = vmatpush1.bf16.msra.mxu0 0
      %1644 = vmatprep.subr.bf16.mxu0 0
      %1645 = vmatpush1.bf16.msra.mxu0 0
      %1646 = vmatprep.subr.bf16.mxu0 0
      %1647 = vmatpush1.bf16.msra.mxu0 0
      %1648 = vmatprep.subr.bf16.mxu0 0
      %1649 = vmatpush1.bf16.msra.mxu0 0
      %1650 = vmatprep.subr.bf16.mxu0 0
      %1651 = vmatpush1.bf16.msra.mxu0 0
      %1652 = vmatprep.mubr.bf16.mxu0 0
      %1653 = vmatmul.mubr.bf16.gmra.mrb[0].mxu0 %v1603
      %v1654 = vpop.f32.mrb[0].mxu0
      %v1655 = vadd.f32 0.0, %v1654
      %v1656 = vpop.f32.mrb[0].mxu0
      %v1657 = vpop.f32.mrb[0].mxu0
      %v1658 = vadd.f32 0.0, %v1657
      %v1659 = vpop.f32.mrb[0].mxu0
      %1660 = vmatprep.mubr.bf16.mxu0 0
      %1661 = vmatmul.mubr.bf16.gmra.mrb[0].mxu0 %v1606
      %v1662 = vpop.f32.mrb[0].mxu0
      %v1663 = vadd.f32 0.0, %v1662
      %v1664 = vpop.f32.mrb[0].mxu0
      %v1665 = vpop.f32.mrb[0].mxu0
      %v1666 = vadd.f32 0.0, %v1665
      %v1667 = vpop.f32.mrb[0].mxu0
      %1668 = vmatprep.mubr.bf16.mxu0 0
      %1669 = vmatmul.mubr.bf16.gmra.mrb[0].mxu0 %v1609
      %v1670 = vpop.f32.mrb[0].mxu0
      %v1671 = vadd.f32 0.0, %v1670
      %v1672 = vpop.f32.mrb[0].mxu0
      %v1673 = vpop.f32.mrb[0].mxu0
      %v1674 = vadd.f32 0.0, %v1673
      %v1675 = vpop.f32.mrb[0].mxu0
      %1676 = vmatprep.mubr.bf16.mxu0 0
      %1677 = vmatmul.mubr.bf16.gmra.mrb[0].mxu0 %v1612
      %v1678 = vpop.f32.mrb[0].mxu0
      %v1679 = vadd.f32 0.0, %v1678
      %v1680 = vpop.f32.mrb[0].mxu0
      %v1681 = vpop.f32.mrb[0].mxu0
      %v1682 = vadd.f32 0.0, %v1681
      %v1683 = vpop.f32.mrb[0].mxu0
      %1684 = vmatprep.mubr.bf16.mxu0 0
      %1685 = vmatmul.mubr.bf16.gmra.mrb[0].mxu0 %v1615
      %v1686 = vpop.f32.mrb[0].mxu0
      %v1687 = vadd.f32 0.0, %v1686
      %v1688 = vpop.f32.mrb[0].mxu0
      %v1689 = vpop.f32.mrb[0].mxu0
      %v1690 = vadd.f32 0.0, %v1689
      %v1691 = vpop.f32.mrb[0].mxu0
      %1692 = vdwg.mxu0
      %v1693 = vadd.f32 %v1555, %v1655
      %v1694 = vadd.f32 %v1556, %v1658
      %v1695 = vadd.f32 %v1557, %v1663
      %v1696 = vadd.f32 %v1558, %v1666
      %v1697 = vadd.f32 %v1559, %v1671
      %v1698 = vadd.f32 %v1560, %v1674
      %v1699 = vadd.f32 %v1561, %v1679
      %v1700 = vadd.f32 %v1562, %v1682
      %v1701 = vadd.f32 %v1563, %v1687
      %v1702 = vadd.f32 %v1564, %v1690
      %v1703 = vld [vmem:[%s5] sm:$0x1]
      %v1705 = vlaneseq
      %v1706 = vshrl.u32 %v1705, 7
      %v1707 = vsub.s32 0, %v1706
      %v1708 = vrot.slane %v1703, %v1707
      %v1710 = vadd.f32 %v1693, %v1708
      %v1711 = vadd.f32 %v1694, %v1708
      %v1712 = vadd.f32 %v1695, %v1708
      %v1713 = vadd.f32 %v1696, %v1708
      %v1714 = vadd.f32 %v1697, %v1708
      %v1715 = vadd.f32 %v1698, %v1708
      %v1716 = vadd.f32 %v1699, %v1708
      %v1717 = vadd.f32 %v1700, %v1708
      %v1718 = vadd.f32 %v1701, %v1708
      %v1719 = vadd.f32 %v1702, %v1708
      %v1720 = vmax.f32 %v1710, 0.0
      %v1721 = vmax.f32 %v1711, 0.0
      %v1722 = vmax.f32 %v1712, 0.0
      %v1723 = vmax.f32 %v1713, 0.0
      %v1724 = vmax.f32 %v1714, 0.0
      %v1725 = vmax.f32 %v1715, 0.0
      %v1726 = vmax.f32 %v1716, 0.0
      %v1727 = vmax.f32 %v1717, 0.0
      %v1728 = vmax.f32 %v1718, 0.0
      %v1729 = vmax.f32 %v1719, 0.0
      %v1730 = vpack.c.bf16 %v1721, %v1720
      %v1731 = vpack.c.bf16 %v1723, %v1722
      %v1732 = vpack.c.bf16 %v1725, %v1724
      %v1733 = vpack.c.bf16 %v1727, %v1726
      %v1734 = vpack.c.bf16 %v1729, %v1728
      %v1735 = vld [vmem:[%s6] sm:$0x3]
      %v1736 = vld [vmem:[%s7] sm:$0x1]
      %v1738 = vlaneseq
      %v1739 = vshrl.u32 %v1738, 7
      %v1740 = vsub.s32 0, %v1739
      %v1741 = vrot.slane %v1736, %v1740
      %v1744 = vsel %vm307, %v1730, 0
      %v1747 = vsel %vm307, %v1731, 0
      %v1750 = vsel %vm307, %v1732, 0
      %v1753 = vsel %vm307, %v1733, 0
      %v1756 = vsel %vm307, %v1734, 0
      %v1759 = vsel %vm562, %v1735, 0
      %1761 = vmatprep.subr.bf16.mxu0 0
      %1762 = vmatpush1.bf16.msra.mxu0 %v1759
      %1763 = vmatprep.subr.bf16.mxu0 0
      %1764 = vmatpush1.bf16.msra.mxu0 0
      %1765 = vmatprep.subr.bf16.mxu0 0
      %1766 = vmatpush1.bf16.msra.mxu0 0
      %1767 = vmatprep.subr.bf16.mxu0 0
      %1768 = vmatpush1.bf16.msra.mxu0 0
      %1769 = vmatprep.subr.bf16.mxu0 0
      %1770 = vmatpush1.bf16.msra.mxu0 0
      %1771 = vmatprep.subr.bf16.mxu0 0
      %1772 = vmatpush1.bf16.msra.mxu0 0
      %1773 = vmatprep.subr.bf16.mxu0 0
      %1774 = vmatpush1.bf16.msra.mxu0 0
      %1775 = vmatprep.subr.bf16.mxu0 0
      %1776 = vmatpush1.bf16.msra.mxu0 0
      %1777 = vmatprep.subr.bf16.mxu0 0
      %1778 = vmatpush1.bf16.msra.mxu0 0
      %1779 = vmatprep.subr.bf16.mxu0 0
      %1780 = vmatpush1.bf16.msra.mxu0 0
      %1781 = vmatprep.subr.bf16.mxu0 0
      %1782 = vmatpush1.bf16.msra.mxu0 0
      %1783 = vmatprep.subr.bf16.mxu0 0
      %1784 = vmatpush1.bf16.msra.mxu0 0
      %1785 = vmatprep.subr.bf16.mxu0 0
      %1786 = vmatpush1.bf16.msra.mxu0 0
      %1787 = vmatprep.subr.bf16.mxu0 0
      %1788 = vmatpush1.bf16.msra.mxu0 0
      %1789 = vmatprep.subr.bf16.mxu0 0
      %1790 = vmatpush1.bf16.msra.mxu0 0
      %1791 = vmatprep.subr.bf16.mxu0 0
      %1792 = vmatpush1.bf16.msra.mxu0 0
      %1793 = vmatprep.mubr.bf16.mxu0 0
      %1794 = vmatmul.mubr.bf16.gmra.mrb[0].mxu0 %v1744
      %v1795 = vpop.f32.mrb[0].mxu0
      %v1796 = vadd.f32 %v1741, %v1795
      %v1797 = vpop.f32.mrb[0].mxu0
      %v1798 = vpop.f32.mrb[0].mxu0
      %v1799 = vadd.f32 %v1741, %v1798
      %v1800 = vpop.f32.mrb[0].mxu0
      %1801 = vmatprep.mubr.bf16.mxu0 0
      %1802 = vmatmul.mubr.bf16.gmra.mrb[0].mxu0 %v1747
      %v1803 = vpop.f32.mrb[0].mxu0
      %v1804 = vadd.f32 %v1741, %v1803
      %v1805 = vpop.f32.mrb[0].mxu0
      %v1806 = vpop.f32.mrb[0].mxu0
      %v1807 = vadd.f32 %v1741, %v1806
      %v1808 = vpop.f32.mrb[0].mxu0
      %1809 = vmatprep.mubr.bf16.mxu0 0
      %1810 = vmatmul.mubr.bf16.gmra.mrb[0].mxu0 %v1750
      %v1811 = vpop.f32.mrb[0].mxu0
      %v1812 = vadd.f32 %v1741, %v1811
      %v1813 = vpop.f32.mrb[0].mxu0
      %v1814 = vpop.f32.mrb[0].mxu0
      %v1815 = vadd.f32 %v1741, %v1814
      %v1816 = vpop.f32.mrb[0].mxu0
      %1817 = vmatprep.mubr.bf16.mxu0 0
      %1818 = vmatmul.mubr.bf16.gmra.mrb[0].mxu0 %v1753
      %v1819 = vpop.f32.mrb[0].mxu0
      %v1820 = vadd.f32 %v1741, %v1819
      %v1821 = vpop.f32.mrb[0].mxu0
      %v1822 = vpop.f32.mrb[0].mxu0
      %v1823 = vadd.f32 %v1741, %v1822
      %v1824 = vpop.f32.mrb[0].mxu0
      %1825 = vmatprep.mubr.bf16.mxu0 0
      %1826 = vmatmul.mubr.bf16.gmra.mrb[0].mxu0 %v1756
      %v1827 = vpop.f32.mrb[0].mxu0
      %v1828 = vadd.f32 %v1741, %v1827
      %v1829 = vpop.f32.mrb[0].mxu0
      %v1830 = vpop.f32.mrb[0].mxu0
      %v1831 = vadd.f32 %v1741, %v1830
      %v1832 = vpop.f32.mrb[0].mxu0
      %1833 = vdwg.mxu0
      %v1834 = vld [vmem:[%s300] sm:$0xff]
      %v1835 = vld [vmem:[%s300 + $0x8] sm:$0xff]
      %v1836 = vld [vmem:[%s300 + $0x10] sm:$0xff]
      %v1837 = vld [vmem:[%s300 + $0x18] sm:$0xff]
      %v1838 = vld [vmem:[%s300 + $0x20] sm:$0xff]
      %v1839 = vld [vmem:[%s300 + $0x28] sm:$0xff]
      %v1840 = vld [vmem:[%s300 + $0x30] sm:$0xff]
      %v1841 = vld [vmem:[%s300 + $0x38] sm:$0xff]
      %v1842 = vld [vmem:[%s300 + $0x40] sm:$0xff]
      %v1843 = vld [vmem:[%s300 + $0x48] sm:$0xff]
      %v1844 = vadd.f32 %v1796, %v1834
      %v1845 = vadd.f32 %v1799, %v1835
      %v1846 = vadd.f32 %v1804, %v1836
      %v1847 = vadd.f32 %v1807, %v1837
      %v1848 = vadd.f32 %v1812, %v1838
      %v1849 = vadd.f32 %v1815, %v1839
      %v1850 = vadd.f32 %v1820, %v1840
      %v1851 = vadd.f32 %v1823, %v1841
      %v1852 = vadd.f32 %v1828, %v1842
      %v1853 = vadd.f32 %v1831, %v1843
      %v1854 = vmax.f32 %v1844, 0.0
      %v1855 = vmax.f32 %v1845, 0.0
      %v1856 = vmax.f32 %v1846, 0.0
      %v1857 = vmax.f32 %v1847, 0.0
      %v1858 = vmax.f32 %v1848, 0.0
      %v1859 = vmax.f32 %v1849, 0.0
      %v1860 = vmax.f32 %v1850, 0.0
      %v1861 = vmax.f32 %v1851, 0.0
      %v1862 = vmax.f32 %v1852, 0.0
      %v1863 = vmax.f32 %v1853, 0.0
      %1864 = vst.msk [vmem:[%s305] sm:$0xff] %vm340, %v1854
      %1865 = vst.msk [vmem:[%s305 + $0x8] sm:$0xff] %vm340, %v1855
      %1866 = vst.msk [vmem:[%s305 + $0x10] sm:$0xff] %vm340, %v1856
      %1867 = vst.msk [vmem:[%s305 + $0x18] sm:$0xff] %vm340, %v1857
      %1868 = vst.msk [vmem:[%s305 + $0x20] sm:$0xff] %vm340, %v1858
      %1869 = vst.msk [vmem:[%s305 + $0x28] sm:$0xff] %vm340, %v1859
      %1870 = vst.msk [vmem:[%s305 + $0x30] sm:$0xff] %vm340, %v1860
      %1871 = vst.msk [vmem:[%s305 + $0x38] sm:$0xff] %vm340, %v1861
      %1872 = vst.msk [vmem:[%s305 + $0x40] sm:$0xff] %vm340, %v1862
      %1873 = vst.msk [vmem:[%s305 + $0x48] sm:$0xff] %vm340, %v1863
      %p1874 = scmp.lt.s32.totalorder %s19, 1
      %s1875 = scalar_select %p1874, %s19, 1
      %s1876 = smul.addr %s1875, 10
      %s1877 = smul.addr %s1876, 8
      %s1878 = scalar_lea.vmem %s8, %s1877
      // Predicated region
      $region53: #{tpu_custom_call.1} parent=51 // pred_check
        %p1879 = pneg %p210
      $region54: #{tpu_custom_call.1} parent=51 // pred_check_branch
        %1881 = sbr.rel (%p1879) target = $region56
      $region55: #{tpu_custom_call.1} parent=51 // pred_region
        _
      $region56: #{tpu_custom_call.1} parent=51 // pred_fallthru
        _
    $region52: #{tpu_custom_call.1} parent=5 // pred_fallthru
      _
    %p1882 = scmp.le.s32.totalorder 2, %s14
    // Predicated region
    $region57: #{tpu_custom_call.1} parent=5 // pred_check
      %p1883 = pneg %p1882
    $region58: #{tpu_custom_call.1} parent=5 // pred_check_branch
      %1885 = sbr.rel (%p1883) target = $region60
    $region59: #{tpu_custom_call.1} parent=5 // pred_region
      %s1886 = ssub.s32 %s14, 2
      // Predicated region
      $region61: #{tpu_custom_call.1} parent=59 // pred_check
        %p1887 = pneg %p216
      $region62: #{tpu_custom_call.1} parent=59 // pred_check_branch
        %1889 = sbr.rel (%p1887) target = $region64
      $region63: #{tpu_custom_call.1} parent=59 // pred_region
        %p1890 = scmp.lt.s32.totalorder %s20, 1
        %s1891 = scalar_select %p1890, %s20, 1
        %s1892 = smul.addr %s1891, 10
        %s1893 = smul.addr %s1892, 8
        %s1894 = scalar_lea.vmem %s8, %s1893
      $region64: #{tpu_custom_call.1} parent=59 // pred_fallthru
        _
    $region60: #{tpu_custom_call.1} parent=5 // pred_fallthru
      _
  $region6: #{tpu_custom_call.1} parent=0 // loop_footer
    %s18 = sadd.s32 1, %s14
  $region7: #{tpu_custom_call.1} parent=0 // loop_footer_branch
    %13 = sbr.rel target = $region3
  $region8: #{tpu_custom_call.1} parent=0 // loop_exit
    _

</llo_original>
